<compile_context>
chip_gen: v5e
topology: v5e:2x2
jax: 0.10.0
libtpu: 0.0.40
codegen_flags: <defaults>
</compile_context>

<pallas_src>
import jax
import jax.numpy as jnp
from jax import lax
from jax.experimental import pallas as pl
from jax.experimental.pallas import tpu as pltpu

BN_EPS = 1e-5
INV_SQRT2 = 0.7071067811865476

# Budget constant: live f32 (C, tile) value slabs in the main kernel plus the
# double-buffered input/output pipeline blocks.
_LIVE_SLABS = 12

_VMEM_CAP_CACHE = None


def _vmem_capacity_bytes() -> int:
    """Physical VMEM of the current generation (fallback: v7x per-TC 64 MiB)."""
    global _VMEM_CAP_CACHE
    if _VMEM_CAP_CACHE is None:
        try:
            _VMEM_CAP_CACHE = int(pltpu.get_tpu_info().vmem_capacity_bytes)
        except Exception:
            _VMEM_CAP_CACHE = 64 << 20
    return _VMEM_CAP_CACHE


def _choose_tile(nt: int, cap_cols: int) -> int:
    """Largest token-tile width that divides nt, is a multiple of 128, <= cap."""
    if nt <= cap_cols:
        return nt
    if nt % 128 != 0:
        # TODO(synk): pad + mask the token axis for non-128-multiple extents
        # (padding would perturb the BatchNorm statistics without a mask).
        return nt
    best = 128
    t = 128
    while t <= cap_cols:
        if nt % t == 0:
            best = t
        t += 128
    return best


def _conv1x1(w_ref, b_ref, v):
    # 1x1 conv == channel matmul: (C_out, C_in) @ (C_in, T_tile) + bias(C,1).
    return jnp.dot(w_ref[...], v, preferred_element_type=jnp.float32) + b_ref[...]


def _stats1_kernel(x_ref, pw_w_ref, pw_b_ref, s_ref, ss_ref):
    """Partial per-channel sum / sumsq of y1 = pw_conv(x) + x for this tile."""
    x = x_ref[...]                                   # (C, tile) f32
    y1 = _conv1x1(pw_w_ref, pw_b_ref, x) + x
    s_ref[0] = jnp.sum(y1, axis=1, keepdims=True)    # (C, 1)
    ss_ref[0] = jnp.sum(y1 * y1, axis=1, keepdims=True)


def _stats2_kernel(x_ref, pw_w_ref, pw_b_ref, res_w_ref, res_b_ref,
                   sc1_ref, sh1_ref, s_ref, ss_ref):
    """Recompute y1/y2/y4 for this tile; partial stats of y4 (BN #2 input)."""
    x = x_ref[...]
    y1 = _conv1x1(pw_w_ref, pw_b_ref, x) + x                  # pw_conv + residual1
    y2 = y1 * sc1_ref[...] + sh1_ref[...]                     # BN #1 (folded)
    y4 = y2 + _conv1x1(res_w_ref, res_b_ref, y2) + y1         # SSAAMM + residual2
    s_ref[0] = jnp.sum(y4, axis=1, keepdims=True)
    ss_ref[0] = jnp.sum(y4 * y4, axis=1, keepdims=True)


def _main_kernel(x_ref, pw_w_ref, pw_b_ref, res_w_ref, res_b_ref,
                 fc1_w_ref, fc1_b_ref, fc2_w_ref, fc2_b_ref,
                 sc1_ref, sh1_ref, sc2_ref, sh2_ref, out_ref):
    """Full fused forward for one token tile with both BN scale/shifts known."""
    x = x_ref[...]
    y1 = _conv1x1(pw_w_ref, pw_b_ref, x) + x                  # pw_conv + residual1
    y2 = y1 * sc1_ref[...] + sh1_ref[...]                     # BN #1
    y4 = y2 + _conv1x1(res_w_ref, res_b_ref, y2) + y1         # SSAAMM + residual2
    y5 = y4 * sc2_ref[...] + sh2_ref[...]                     # BN #2
    h = _conv1x1(fc1_w_ref, fc1_b_ref, y5)                    # CMLP fc1
    h = 0.5 * h * (1.0 + lax.erf(h * INV_SQRT2))              # exact GELU
    out_ref[...] = _conv1x1(fc2_w_ref, fc2_b_ref, h) + y4     # fc2 + residual3


def _bn_scale_shift(sum_partials, sumsq_partials, gamma, beta, count):
    """Finalize batch stats -> per-channel (scale, shift), tiny (C,1) math."""
    s = jnp.sum(sum_partials, axis=0)        # (C, 1)
    ss = jnp.sum(sumsq_partials, axis=0)     # (C, 1)
    mu = s / count
    var = jnp.maximum(ss / count - mu * mu, 0.0)
    scale = gamma * lax.rsqrt(var + BN_EPS)
    shift = beta - mu * scale
    return scale, shift


def _eassfem_forward_impl(x_nchw, params):
    N, C, H, W = x_nchw.shape
    NT = N * H * W

    # One cheap wrapper transpose: channels on sublanes, batch merged into the
    # lane/token axis -> single wide matmul per conv1x1, single-axis BN reduce.
    x = jnp.transpose(x_nchw.reshape(N, C, H * W), (1, 0, 2)).reshape(C, NT)

    # Generation-aware VMEM budget and token-tile width.
    cap = _vmem_capacity_bytes()
    budget = (cap * 4) // 5                                # ~20% headroom
    weight_bytes = 4 * C * C * 4 + 12 * C * 4              # all small operands
    cap_cols = max(128, (budget - weight_bytes) // (_LIVE_SLABS * C * 4))
    tile_t = _choose_tile(NT, cap_cols)
    num_tiles = NT // tile_t
    vmem_limit = int(min(budget, max(_LIVE_SLABS * C * tile_t * 4 + weight_bytes,
                                     4 << 20)))

    kp = pltpu.CompilerParams(
        dimension_semantics=("parallel",),   # independent tiles -> both TCs on v7x
        vmem_limit_bytes=vmem_limit)

    x_spec = pl.BlockSpec((C, tile_t), lambda i: (0, i))
    w_spec = pl.BlockSpec((C, C), lambda i: (0, 0))
    b_spec = pl.BlockSpec((C, 1), lambda i: (0, 0))
    stat_spec = pl.BlockSpec((1, C, 1), lambda i: (i, 0, 0))
    stat_shape = jax.ShapeDtypeStruct((num_tiles, C, 1), jnp.float32)

    # Pass 1: BN #1 batch statistics (per-tile partials, reduced in JAX).
    s1, ss1 = pl.pallas_call(
        _stats1_kernel,
        grid=(num_tiles,),
        in_specs=[x_spec, w_spec, b_spec],
        out_specs=(stat_spec, stat_spec),
        out_shape=(stat_shape, stat_shape),
        compiler_params=kp,
    )(x, params["pw_w"], params["pw_b"])
    sc1, sh1 = _bn_scale_shift(s1, ss1, params["bn_g"], params["bn_b"], NT)

    # Pass 2: BN #2 batch statistics (of y4), recomputing y1/y2/y4 per tile.
    s2, ss2 = pl.pallas_call(
        _stats2_kernel,
        grid=(num_tiles,),
        in_specs=[x_spec, w_spec, b_spec, w_spec, b_spec, b_spec, b_spec],
        out_specs=(stat_spec, stat_spec),
        out_shape=(stat_shape, stat_shape),
        compiler_params=kp,
    )(x, params["pw_w"], params["pw_b"], params["res_w"], params["res_b"],
      sc1, sh1)
    sc2, sh2 = _bn_scale_shift(s2, ss2, params["bn_g"], params["bn_b"], NT)

    # Pass 3: full fused forward, lane-dense (C, tile) output stores.
    out = pl.pallas_call(
        _main_kernel,
        grid=(num_tiles,),
        in_specs=[x_spec, w_spec, b_spec, w_spec, b_spec,
                  w_spec, b_spec, w_spec, b_spec,
                  b_spec, b_spec, b_spec, b_spec],
        out_specs=pl.BlockSpec((C, tile_t), lambda i: (0, i)),
        out_shape=jax.ShapeDtypeStruct((C, NT), jnp.float32),
        compiler_params=kp,
    )(x, params["pw_w"], params["pw_b"], params["res_w"], params["res_b"],
      params["fc1_w"], params["fc1_b"], params["fc2_w"], params["fc2_b"],
      sc1, sh1, sc2, sh2)

    # Undo the wrapper transpose: (C, N*T) -> (N, C, H, W).
    return jnp.transpose(out.reshape(C, N, H * W), (1, 0, 2)).reshape(N, C, H, W)


eassfem_forward = jax.jit(_eassfem_forward_impl)


def reference_forward(x, p):
    """Pure-JAX NCHW reference of the same forward semantics (two-pass BN)."""
    def conv1x1(v, w, b):   # w: (Cout, Cin), b: (Cout, 1)
        return jnp.einsum("nchw,dc->ndhw", v, w) + b.reshape(1, -1, 1, 1)

    def bn(v):
        mu = jnp.mean(v, axis=(0, 2, 3), keepdims=True)
        var = jnp.mean((v - mu) ** 2, axis=(0, 2, 3), keepdims=True)
        return ((v - mu) / jnp.sqrt(var + BN_EPS)
                * p["bn_g"].reshape(1, -1, 1, 1)
                + p["bn_b"].reshape(1, -1, 1, 1))

    y1 = conv1x1(x, p["pw_w"], p["pw_b"]) + x
    y2 = bn(y1)
    y3 = y2 + conv1x1(y2, p["res_w"], p["res_b"])
    y4 = y3 + y1
    y5 = bn(y4)
    h = conv1x1(y5, p["fc1_w"], p["fc1_b"])
    h = jax.nn.gelu(h, approximate=False)
    y6 = conv1x1(h, p["fc2_w"], p["fc2_b"])
    return y6 + y4


if __name__ == "__main__":
    # SSAAMM(channels, factor=16) requires channels % 16 == 0; the residual
    # adds require out_channels == in_channels -> C = 16.  H*W = 256 keeps the
    # token (lane) axis a dense multiple of 128.
    N, C, H, W = 2, 16, 16, 16

    key = jax.random.PRNGKey(0)
    ks = jax.random.split(key, 11)
    x = jax.random.normal(ks[0], (N, C, H, W), jnp.float32)

    # Conv weights stored PyTorch-style as (C_out, C_in) so the kernel computes
    # W @ x; biases / BN affine as (C, 1) so they broadcast over (C, tokens).
    params = {
        "pw_w":  jax.random.normal(ks[1],  (C, C), jnp.float32) * 0.1,
        "pw_b":  jax.random.normal(ks[2],  (C, 1), jnp.float32) * 0.1,
        "bn_g":  1.0 + jax.random.normal(ks[3], (C, 1), jnp.float32) * 0.1,
        "bn_b":  jax.random.normal(ks[4],  (C, 1), jnp.float32) * 0.1,
        "res_w": jax.random.normal(ks[5],  (C, C), jnp.float32) * 0.1,
        "res_b": jax.random.normal(ks[6],  (C, 1), jnp.float32) * 0.1,
        "fc1_w": jax.random.normal(ks[7],  (C, C), jnp.float32) * 0.1,
        "fc1_b": jax.random.normal(ks[8],  (C, 1), jnp.float32) * 0.1,
        "fc2_w": jax.random.normal(ks[9],  (C, C), jnp.float32) * 0.1,
        "fc2_b": jax.random.normal(ks[10], (C, 1), jnp.float32) * 0.1,
    }

    out = jax.block_until_ready(eassfem_forward(x, params))
    ref = jax.block_until_ready(reference_forward(x, params))

    assert out.shape == (N, C, H, W), out.shape
    assert out.dtype == jnp.float32
    assert jnp.allclose(out, ref, atol=2e-4, rtol=2e-4), (
        "Pallas output mismatch vs JAX reference: "
        f"max|diff|={float(jnp.max(jnp.abs(out - ref)))}")

    print("KERNEL_OK")
</pallas_src>

<mosaic_0001>
module attributes {stable_mosaic.version = 11 : i64} {
  func.func @_stats1_kernel(%arg0: i32, %arg1: memref<16x512xf32, #tpu.memory_space<vmem>>, %arg2: memref<16x16xf32, #tpu.memory_space<vmem>>, %arg3: memref<16x1xf32, #tpu.memory_space<vmem>>, %arg4: memref<1x16x1xf32, #tpu.memory_space<vmem>>, %arg5: memref<1x16x1xf32, #tpu.memory_space<vmem>>) attributes {dimension_semantics = [#tpu.dimension_semantics<parallel>], iteration_bounds = array<i64: 1>, scalar_prefetch = 0 : i64, scratch_operands = 0 : i64, tpu.core_type = #tpu.core_type<tc>, window_params = [{transform_indices = @transform_0, window_bounds = array<i64: 16, 512>}, {pipeline_mode = #tpu.pipeline_mode<synchronous>, transform_indices = @transform_1, window_bounds = array<i64: 16, 16>}, {pipeline_mode = #tpu.pipeline_mode<synchronous>, transform_indices = @transform_2, window_bounds = array<i64: 16, 1>}, {transform_indices = @transform_3, window_bounds = array<i64: 1, 16, 1>}, {transform_indices = @transform_4, window_bounds = array<i64: 1, 16, 1>}]} {
    %c0 = arith.constant 0 : index
    %c0_0 = arith.constant 0 : index
    %0 = vector.load %arg1[%c0, %c0_0] : memref<16x512xf32, #tpu.memory_space<vmem>>, vector<16x512xf32>
    %c0_1 = arith.constant 0 : index
    %c0_2 = arith.constant 0 : index
    %1 = vector.load %arg2[%c0_1, %c0_2] : memref<16x16xf32, #tpu.memory_space<vmem>>, vector<16x16xf32>
    %cst = arith.constant dense<0.000000e+00> : vector<16x512xf32>
    %2 = tpu.matmul %1, %0, %cst {dimension_numbers = #tpu.dot_dimension_numbers<[1], [0], [0], [1], [0, 0, 1, 1], [], []>} : vector<16x16xf32>, vector<16x512xf32>, vector<16x512xf32> -> vector<16x512xf32>
    %c0_3 = arith.constant 0 : index
    %c0_4 = arith.constant 0 : index
    %3 = vector.load %arg3[%c0_3, %c0_4] : memref<16x1xf32, #tpu.memory_space<vmem>>, vector<16x1xf32>
    %4 = vector.broadcast %3 : vector<16x1xf32> to vector<16x512xf32>
    %5 = arith.addf %2, %4 : vector<16x512xf32>
    %6 = arith.addf %5, %0 : vector<16x512xf32>
    %cst_5 = arith.constant dense<0.000000e+00> : vector<16xf32>
    %7 = vector.multi_reduction <add>, %6, %cst_5 [1] : vector<16x512xf32> to vector<16xf32>
    %8 = vector.shape_cast %7 : vector<16xf32> to vector<16x1xf32>
    %c0_6 = arith.constant 0 : index
    %c0_7 = arith.constant 0 : index
    %c0_8 = arith.constant 0 : index
    %9 = vector.load %arg4[%c0_6, %c0_7, %c0_8] : memref<1x16x1xf32, #tpu.memory_space<vmem>>, vector<1x16x1xf32>
    %10 = vector.shape_cast %9 : vector<1x16x1xf32> to vector<16x1xf32>
    %11 = vector.shape_cast %8 : vector<16x1xf32> to vector<1x16x1xf32>
    tpu.vector_store %arg4[%c0_6, %c0_7, %c0_8], %11 {strides = array<i32>} : memref<1x16x1xf32, #tpu.memory_space<vmem>>, vector<1x16x1xf32>,
    %12 = arith.mulf %6, %6 : vector<16x512xf32>
    %cst_9 = arith.constant dense<0.000000e+00> : vector<16xf32>
    %13 = vector.multi_reduction <add>, %12, %cst_9 [1] : vector<16x512xf32> to vector<16xf32>
    %14 = vector.shape_cast %13 : vector<16xf32> to vector<16x1xf32>
    %c0_10 = arith.constant 0 : index
    %c0_11 = arith.constant 0 : index
    %c0_12 = arith.constant 0 : index
    %15 = vector.load %arg5[%c0_10, %c0_11, %c0_12] : memref<1x16x1xf32, #tpu.memory_space<vmem>>, vector<1x16x1xf32>
    %16 = vector.shape_cast %15 : vector<1x16x1xf32> to vector<16x1xf32>
    %17 = vector.shape_cast %14 : vector<16x1xf32> to vector<1x16x1xf32>
    tpu.vector_store %arg5[%c0_10, %c0_11, %c0_12], %17 {strides = array<i32>} : memref<1x16x1xf32, #tpu.memory_space<vmem>>, vector<1x16x1xf32>,
    return
  }
  func.func @transform_0(%arg0: i32) -> (i32, i32) {
    %c0_i32 = arith.constant 0 : i32
    %c0_i32_0 = arith.constant 0 : i32
    return %c0_i32, %arg0 : i32, i32
  }
  func.func @transform_1(%arg0: i32) -> (i32, i32) {
    %c0_i32 = arith.constant 0 : i32
    %c0_i32_0 = arith.constant 0 : i32
    %c0_i32_1 = arith.constant 0 : i32
    return %c0_i32, %c0_i32_0 : i32, i32
  }
  func.func @transform_2(%arg0: i32) -> (i32, i32) {
    %c0_i32 = arith.constant 0 : i32
    %c0_i32_0 = arith.constant 0 : i32
    %c0_i32_1 = arith.constant 0 : i32
    return %c0_i32, %c0_i32_0 : i32, i32
  }
  func.func @transform_3(%arg0: i32) -> (i32, i32, i32) {
    %c0_i32 = arith.constant 0 : i32
    %c0_i32_0 = arith.constant 0 : i32
    %c0_i32_1 = arith.constant 0 : i32
    return %arg0, %c0_i32, %c0_i32_0 : i32, i32, i32
  }
  func.func @transform_4(%arg0: i32) -> (i32, i32, i32) {
    %c0_i32 = arith.constant 0 : i32
    %c0_i32_0 = arith.constant 0 : i32
    %c0_i32_1 = arith.constant 0 : i32
    return %arg0, %c0_i32, %c0_i32_0 : i32, i32, i32
  }
}

module attributes {stable_mosaic.version = 11 : i64} {
  func.func @_stats2_kernel(%arg0: i32, %arg1: memref<16x512xf32, #tpu.memory_space<vmem>>, %arg2: memref<16x16xf32, #tpu.memory_space<vmem>>, %arg3: memref<16x1xf32, #tpu.memory_space<vmem>>, %arg4: memref<16x16xf32, #tpu.memory_space<vmem>>, %arg5: memref<16x1xf32, #tpu.memory_space<vmem>>, %arg6: memref<16x1xf32, #tpu.memory_space<vmem>>, %arg7: memref<16x1xf32, #tpu.memory_space<vmem>>, %arg8: memref<1x16x1xf32, #tpu.memory_space<vmem>>, %arg9: memref<1x16x1xf32, #tpu.memory_space<vmem>>) attributes {dimension_semantics = [#tpu.dimension_semantics<parallel>], iteration_bounds = array<i64: 1>, scalar_prefetch = 0 : i64, scratch_operands = 0 : i64, tpu.core_type = #tpu.core_type<tc>, window_params = [{transform_indices = @transform_0, window_bounds = array<i64: 16, 512>}, {pipeline_mode = #tpu.pipeline_mode<synchronous>, transform_indices = @transform_1, window_bounds = array<i64: 16, 16>}, {pipeline_mode = #tpu.pipeline_mode<synchronous>, transform_indices = @transform_2, window_bounds = array<i64: 16, 1>}, {pipeline_mode = #tpu.pipeline_mode<synchronous>, transform_indices = @transform_3, window_bounds = array<i64: 16, 16>}, {pipeline_mode = #tpu.pipeline_mode<synchronous>, transform_indices = @transform_4, window_bounds = array<i64: 16, 1>}, {pipeline_mode = #tpu.pipeline_mode<synchronous>, transform_indices = @transform_5, window_bounds = array<i64: 16, 1>}, {pipeline_mode = #tpu.pipeline_mode<synchronous>, transform_indices = @transform_6, window_bounds = array<i64: 16, 1>}, {transform_indices = @transform_7, window_bounds = array<i64: 1, 16, 1>}, {transform_indices = @transform_8, window_bounds = array<i64: 1, 16, 1>}]} {
    %c0 = arith.constant 0 : index
    %c0_0 = arith.constant 0 : index
    %0 = vector.load %arg1[%c0, %c0_0] : memref<16x512xf32, #tpu.memory_space<vmem>>, vector<16x512xf32>
    %c0_1 = arith.constant 0 : index
    %c0_2 = arith.constant 0 : index
    %1 = vector.load %arg2[%c0_1, %c0_2] : memref<16x16xf32, #tpu.memory_space<vmem>>, vector<16x16xf32>
    %cst = arith.constant dense<0.000000e+00> : vector<16x512xf32>
    %2 = tpu.matmul %1, %0, %cst {dimension_numbers = #tpu.dot_dimension_numbers<[1], [0], [0], [1], [0, 0, 1, 1], [], []>} : vector<16x16xf32>, vector<16x512xf32>, vector<16x512xf32> -> vector<16x512xf32>
    %c0_3 = arith.constant 0 : index
    %c0_4 = arith.constant 0 : index
    %3 = vector.load %arg3[%c0_3, %c0_4] : memref<16x1xf32, #tpu.memory_space<vmem>>, vector<16x1xf32>
    %4 = vector.broadcast %3 : vector<16x1xf32> to vector<16x512xf32>
    %5 = arith.addf %2, %4 : vector<16x512xf32>
    %6 = arith.addf %5, %0 : vector<16x512xf32>
    %c0_5 = arith.constant 0 : index
    %c0_6 = arith.constant 0 : index
    %7 = vector.load %arg6[%c0_5, %c0_6] : memref<16x1xf32, #tpu.memory_space<vmem>>, vector<16x1xf32>
    %8 = vector.broadcast %7 : vector<16x1xf32> to vector<16x512xf32>
    %9 = arith.mulf %6, %8 : vector<16x512xf32>
    %c0_7 = arith.constant 0 : index
    %c0_8 = arith.constant 0 : index
    %10 = vector.load %arg7[%c0_7, %c0_8] : memref<16x1xf32, #tpu.memory_space<vmem>>, vector<16x1xf32>
    %11 = vector.broadcast %10 : vector<16x1xf32> to vector<16x512xf32>
    %12 = arith.addf %9, %11 : vector<16x512xf32>
    %c0_9 = arith.constant 0 : index
    %c0_10 = arith.constant 0 : index
    %13 = vector.load %arg4[%c0_9, %c0_10] : memref<16x16xf32, #tpu.memory_space<vmem>>, vector<16x16xf32>
    %cst_11 = arith.constant dense<0.000000e+00> : vector<16x512xf32>
    %14 = tpu.matmul %13, %12, %cst_11 {dimension_numbers = #tpu.dot_dimension_numbers<[1], [0], [0], [1], [0, 0, 1, 1], [], []>} : vector<16x16xf32>, vector<16x512xf32>, vector<16x512xf32> -> vector<16x512xf32>
    %c0_12 = arith.constant 0 : index
    %c0_13 = arith.constant 0 : index
    %15 = vector.load %arg5[%c0_12, %c0_13] : memref<16x1xf32, #tpu.memory_space<vmem>>, vector<16x1xf32>
    %16 = vector.broadcast %15 : vector<16x1xf32> to vector<16x512xf32>
    %17 = arith.addf %14, %16 : vector<16x512xf32>
    %18 = arith.addf %12, %17 : vector<16x512xf32>
    %19 = arith.addf %18, %6 : vector<16x512xf32>
    %cst_14 = arith.constant dense<0.000000e+00> : vector<16xf32>
    %20 = vector.multi_reduction <add>, %19, %cst_14 [1] : vector<16x512xf32> to vector<16xf32>
    %21 = vector.shape_cast %20 : vector<16xf32> to vector<16x1xf32>
    %c0_15 = arith.constant 0 : index
    %c0_16 = arith.constant 0 : index
    %c0_17 = arith.constant 0 : index
    %22 = vector.load %arg8[%c0_15, %c0_16, %c0_17] : memref<1x16x1xf32, #tpu.memory_space<vmem>>, vector<1x16x1xf32>
    %23 = vector.shape_cast %22 : vector<1x16x1xf32> to vector<16x1xf32>
    %24 = vector.shape_cast %21 : vector<16x1xf32> to vector<1x16x1xf32>
    tpu.vector_store %arg8[%c0_15, %c0_16, %c0_17], %24 {strides = array<i32>} : memref<1x16x1xf32, #tpu.memory_space<vmem>>, vector<1x16x1xf32>,
    %25 = arith.mulf %19, %19 : vector<16x512xf32>
    %cst_18 = arith.constant dense<0.000000e+00> : vector<16xf32>
    %26 = vector.multi_reduction <add>, %25, %cst_18 [1] : vector<16x512xf32> to vector<16xf32>
    %27 = vector.shape_cast %26 : vector<16xf32> to vector<16x1xf32>
    %c0_19 = arith.constant 0 : index
    %c0_20 = arith.constant 0 : index
    %c0_21 = arith.constant 0 : index
    %28 = vector.load %arg9[%c0_19, %c0_20, %c0_21] : memref<1x16x1xf32, #tpu.memory_space<vmem>>, vector<1x16x1xf32>
    %29 = vector.shape_cast %28 : vector<1x16x1xf32> to vector<16x1xf32>
    %30 = vector.shape_cast %27 : vector<16x1xf32> to vector<1x16x1xf32>
    tpu.vector_store %arg9[%c0_19, %c0_20, %c0_21], %30 {strides = array<i32>} : memref<1x16x1xf32, #tpu.memory_space<vmem>>, vector<1x16x1xf32>,
    return
  }
  func.func @transform_0(%arg0: i32) -> (i32, i32) {
    %c0_i32 = arith.constant 0 : i32
    %c0_i32_0 = arith.constant 0 : i32
    return %c0_i32, %arg0 : i32, i32
  }
  func.func @transform_1(%arg0: i32) -> (i32, i32) {
    %c0_i32 = arith.constant 0 : i32
    %c0_i32_0 = arith.constant 0 : i32
    %c0_i32_1 = arith.constant 0 : i32
    return %c0_i32, %c0_i32_0 : i32, i32
  }
  func.func @transform_2(%arg0: i32) -> (i32, i32) {
    %c0_i32 = arith.constant 0 : i32
    %c0_i32_0 = arith.constant 0 : i32
    %c0_i32_1 = arith.constant 0 : i32
    return %c0_i32, %c0_i32_0 : i32, i32
  }
  func.func @transform_3(%arg0: i32) -> (i32, i32) {
    %c0_i32 = arith.constant 0 : i32
    %c0_i32_0 = arith.constant 0 : i32
    %c0_i32_1 = arith.constant 0 : i32
    return %c0_i32, %c0_i32_0 : i32, i32
  }
  func.func @transform_4(%arg0: i32) -> (i32, i32) {
    %c0_i32 = arith.constant 0 : i32
    %c0_i32_0 = arith.constant 0 : i32
    %c0_i32_1 = arith.constant 0 : i32
    return %c0_i32, %c0_i32_0 : i32, i32
  }
  func.func @transform_5(%arg0: i32) -> (i32, i32) {
    %c0_i32 = arith.constant 0 : i32
    %c0_i32_0 = arith.constant 0 : i32
    %c0_i32_1 = arith.constant 0 : i32
    return %c0_i32, %c0_i32_0 : i32, i32
  }
  func.func @transform_6(%arg0: i32) -> (i32, i32) {
    %c0_i32 = arith.constant 0 : i32
    %c0_i32_0 = arith.constant 0 : i32
    %c0_i32_1 = arith.constant 0 : i32
    return %c0_i32, %c0_i32_0 : i32, i32
  }
  func.func @transform_7(%arg0: i32) -> (i32, i32, i32) {
    %c0_i32 = arith.constant 0 : i32
    %c0_i32_0 = arith.constant 0 : i32
    %c0_i32_1 = arith.constant 0 : i32
    return %arg0, %c0_i32, %c0_i32_0 : i32, i32, i32
  }
  func.func @transform_8(%arg0: i32) -> (i32, i32, i32) {
    %c0_i32 = arith.constant 0 : i32
    %c0_i32_0 = arith.constant 0 : i32
    %c0_i32_1 = arith.constant 0 : i32
    return %arg0, %c0_i32, %c0_i32_0 : i32, i32, i32
  }
}

module attributes {stable_mosaic.version = 11 : i64} {
  func.func @_main_kernel(%arg0: i32, %arg1: memref<16x512xf32, #tpu.memory_space<vmem>>, %arg2: memref<16x16xf32, #tpu.memory_space<vmem>>, %arg3: memref<16x1xf32, #tpu.memory_space<vmem>>, %arg4: memref<16x16xf32, #tpu.memory_space<vmem>>, %arg5: memref<16x1xf32, #tpu.memory_space<vmem>>, %arg6: memref<16x16xf32, #tpu.memory_space<vmem>>, %arg7: memref<16x1xf32, #tpu.memory_space<vmem>>, %arg8: memref<16x16xf32, #tpu.memory_space<vmem>>, %arg9: memref<16x1xf32, #tpu.memory_space<vmem>>, %arg10: memref<16x1xf32, #tpu.memory_space<vmem>>, %arg11: memref<16x1xf32, #tpu.memory_space<vmem>>, %arg12: memref<16x1xf32, #tpu.memory_space<vmem>>, %arg13: memref<16x1xf32, #tpu.memory_space<vmem>>, %arg14: memref<16x512xf32, #tpu.memory_space<vmem>>) attributes {dimension_semantics = [#tpu.dimension_semantics<parallel>], iteration_bounds = array<i64: 1>, scalar_prefetch = 0 : i64, scratch_operands = 0 : i64, tpu.core_type = #tpu.core_type<tc>, window_params = [{transform_indices = @transform_0, window_bounds = array<i64: 16, 512>}, {pipeline_mode = #tpu.pipeline_mode<synchronous>, transform_indices = @transform_1, window_bounds = array<i64: 16, 16>}, {pipeline_mode = #tpu.pipeline_mode<synchronous>, transform_indices = @transform_2, window_bounds = array<i64: 16, 1>}, {pipeline_mode = #tpu.pipeline_mode<synchronous>, transform_indices = @transform_3, window_bounds = array<i64: 16, 16>}, {pipeline_mode = #tpu.pipeline_mode<synchronous>, transform_indices = @transform_4, window_bounds = array<i64: 16, 1>}, {pipeline_mode = #tpu.pipeline_mode<synchronous>, transform_indices = @transform_5, window_bounds = array<i64: 16, 16>}, {pipeline_mode = #tpu.pipeline_mode<synchronous>, transform_indices = @transform_6, window_bounds = array<i64: 16, 1>}, {pipeline_mode = #tpu.pipeline_mode<synchronous>, transform_indices = @transform_7, window_bounds = array<i64: 16, 16>}, {pipeline_mode = #tpu.pipeline_mode<synchronous>, transform_indices = @transform_8, window_bounds = array<i64: 16, 1>}, {pipeline_mode = #tpu.pipeline_mode<synchronous>, transform_indices = @transform_9, window_bounds = array<i64: 16, 1>}, {pipeline_mode = #tpu.pipeline_mode<synchronous>, transform_indices = @transform_10, window_bounds = array<i64: 16, 1>}, {pipeline_mode = #tpu.pipeline_mode<synchronous>, transform_indices = @transform_11, window_bounds = array<i64: 16, 1>}, {pipeline_mode = #tpu.pipeline_mode<synchronous>, transform_indices = @transform_12, window_bounds = array<i64: 16, 1>}, {transform_indices = @transform_13, window_bounds = array<i64: 16, 512>}]} {
    %c0 = arith.constant 0 : index
    %c0_0 = arith.constant 0 : index
    %0 = vector.load %arg1[%c0, %c0_0] : memref<16x512xf32, #tpu.memory_space<vmem>>, vector<16x512xf32>
    %c0_1 = arith.constant 0 : index
    %c0_2 = arith.constant 0 : index
    %1 = vector.load %arg2[%c0_1, %c0_2] : memref<16x16xf32, #tpu.memory_space<vmem>>, vector<16x16xf32>
    %cst = arith.constant dense<0.000000e+00> : vector<16x512xf32>
    %2 = tpu.matmul %1, %0, %cst {dimension_numbers = #tpu.dot_dimension_numbers<[1], [0], [0], [1], [0, 0, 1, 1], [], []>} : vector<16x16xf32>, vector<16x512xf32>, vector<16x512xf32> -> vector<16x512xf32>
    %c0_3 = arith.constant 0 : index
    %c0_4 = arith.constant 0 : index
    %3 = vector.load %arg3[%c0_3, %c0_4] : memref<16x1xf32, #tpu.memory_space<vmem>>, vector<16x1xf32>
    %4 = vector.broadcast %3 : vector<16x1xf32> to vector<16x512xf32>
    %5 = arith.addf %2, %4 : vector<16x512xf32>
    %6 = arith.addf %5, %0 : vector<16x512xf32>
    %c0_5 = arith.constant 0 : index
    %c0_6 = arith.constant 0 : index
    %7 = vector.load %arg10[%c0_5, %c0_6] : memref<16x1xf32, #tpu.memory_space<vmem>>, vector<16x1xf32>
    %8 = vector.broadcast %7 : vector<16x1xf32> to vector<16x512xf32>
    %9 = arith.mulf %6, %8 : vector<16x512xf32>
    %c0_7 = arith.constant 0 : index
    %c0_8 = arith.constant 0 : index
    %10 = vector.load %arg11[%c0_7, %c0_8] : memref<16x1xf32, #tpu.memory_space<vmem>>, vector<16x1xf32>
    %11 = vector.broadcast %10 : vector<16x1xf32> to vector<16x512xf32>
    %12 = arith.addf %9, %11 : vector<16x512xf32>
    %c0_9 = arith.constant 0 : index
    %c0_10 = arith.constant 0 : index
    %13 = vector.load %arg4[%c0_9, %c0_10] : memref<16x16xf32, #tpu.memory_space<vmem>>, vector<16x16xf32>
    %cst_11 = arith.constant dense<0.000000e+00> : vector<16x512xf32>
    %14 = tpu.matmul %13, %12, %cst_11 {dimension_numbers = #tpu.dot_dimension_numbers<[1], [0], [0], [1], [0, 0, 1, 1], [], []>} : vector<16x16xf32>, vector<16x512xf32>, vector<16x512xf32> -> vector<16x512xf32>
    %c0_12 = arith.constant 0 : index
    %c0_13 = arith.constant 0 : index
    %15 = vector.load %arg5[%c0_12, %c0_13] : memref<16x1xf32, #tpu.memory_space<vmem>>, vector<16x1xf32>
    %16 = vector.broadcast %15 : vector<16x1xf32> to vector<16x512xf32>
    %17 = arith.addf %14, %16 : vector<16x512xf32>
    %18 = arith.addf %12, %17 : vector<16x512xf32>
    %19 = arith.addf %18, %6 : vector<16x512xf32>
    %c0_14 = arith.constant 0 : index
    %c0_15 = arith.constant 0 : index
    %20 = vector.load %arg12[%c0_14, %c0_15] : memref<16x1xf32, #tpu.memory_space<vmem>>, vector<16x1xf32>
    %21 = vector.broadcast %20 : vector<16x1xf32> to vector<16x512xf32>
    %22 = arith.mulf %19, %21 : vector<16x512xf32>
    %c0_16 = arith.constant 0 : index
    %c0_17 = arith.constant 0 : index
    %23 = vector.load %arg13[%c0_16, %c0_17] : memref<16x1xf32, #tpu.memory_space<vmem>>, vector<16x1xf32>
    %24 = vector.broadcast %23 : vector<16x1xf32> to vector<16x512xf32>
    %25 = arith.addf %22, %24 : vector<16x512xf32>
    %c0_18 = arith.constant 0 : index
    %c0_19 = arith.constant 0 : index
    %26 = vector.load %arg6[%c0_18, %c0_19] : memref<16x16xf32, #tpu.memory_space<vmem>>, vector<16x16xf32>
    %cst_20 = arith.constant dense<0.000000e+00> : vector<16x512xf32>
    %27 = tpu.matmul %26, %25, %cst_20 {dimension_numbers = #tpu.dot_dimension_numbers<[1], [0], [0], [1], [0, 0, 1, 1], [], []>} : vector<16x16xf32>, vector<16x512xf32>, vector<16x512xf32> -> vector<16x512xf32>
    %c0_21 = arith.constant 0 : index
    %c0_22 = arith.constant 0 : index
    %28 = vector.load %arg7[%c0_21, %c0_22] : memref<16x1xf32, #tpu.memory_space<vmem>>, vector<16x1xf32>
    %29 = vector.broadcast %28 : vector<16x1xf32> to vector<16x512xf32>
    %30 = arith.addf %27, %29 : vector<16x512xf32>
    %cst_23 = arith.constant 5.000000e-01 : f32
    %31 = vector.broadcast %cst_23 : f32 to vector<16x512xf32>
    %32 = arith.mulf %31, %30 : vector<16x512xf32>
    %cst_24 = arith.constant 0.707106769 : f32
    %33 = vector.broadcast %cst_24 : f32 to vector<16x512xf32>
    %34 = arith.mulf %30, %33 : vector<16x512xf32>
    %35 = math.erf %34 : vector<16x512xf32>
    %cst_25 = arith.constant 1.000000e+00 : f32
    %36 = vector.broadcast %cst_25 : f32 to vector<16x512xf32>
    %37 = arith.addf %36, %35 : vector<16x512xf32>
    %38 = arith.mulf %32, %37 : vector<16x512xf32>
    %c0_26 = arith.constant 0 : index
    %c0_27 = arith.constant 0 : index
    %39 = vector.load %arg8[%c0_26, %c0_27] : memref<16x16xf32, #tpu.memory_space<vmem>>, vector<16x16xf32>
    %cst_28 = arith.constant dense<0.000000e+00> : vector<16x512xf32>
    %40 = tpu.matmul %39, %38, %cst_28 {dimension_numbers = #tpu.dot_dimension_numbers<[1], [0], [0], [1], [0, 0, 1, 1], [], []>} : vector<16x16xf32>, vector<16x512xf32>, vector<16x512xf32> -> vector<16x512xf32>
    %c0_29 = arith.constant 0 : index
    %c0_30 = arith.constant 0 : index
    %41 = vector.load %arg9[%c0_29, %c0_30] : memref<16x1xf32, #tpu.memory_space<vmem>>, vector<16x1xf32>
    %42 = vector.broadcast %41 : vector<16x1xf32> to vector<16x512xf32>
    %43 = arith.addf %40, %42 : vector<16x512xf32>
    %44 = arith.addf %43, %19 : vector<16x512xf32>
    %c0_31 = arith.constant 0 : index
    %c0_32 = arith.constant 0 : index
    %45 = vector.load %arg14[%c0_31, %c0_32] : memref<16x512xf32, #tpu.memory_space<vmem>>, vector<16x512xf32>
    tpu.vector_store %arg14[%c0_31, %c0_32], %44 {strides = array<i32>} : memref<16x512xf32, #tpu.memory_space<vmem>>, vector<16x512xf32>,
    return
  }
  func.func @transform_0(%arg0: i32) -> (i32, i32) {
    %c0_i32 = arith.constant 0 : i32
    %c0_i32_0 = arith.constant 0 : i32
    return %c0_i32, %arg0 : i32, i32
  }
  func.func @transform_1(%arg0: i32) -> (i32, i32) {
    %c0_i32 = arith.constant 0 : i32
    %c0_i32_0 = arith.constant 0 : i32
    %c0_i32_1 = arith.constant 0 : i32
    return %c0_i32, %c0_i32_0 : i32, i32
  }
  func.func @transform_2(%arg0: i32) -> (i32, i32) {
    %c0_i32 = arith.constant 0 : i32
    %c0_i32_0 = arith.constant 0 : i32
    %c0_i32_1 = arith.constant 0 : i32
    return %c0_i32, %c0_i32_0 : i32, i32
  }
  func.func @transform_3(%arg0: i32) -> (i32, i32) {
    %c0_i32 = arith.constant 0 : i32
    %c0_i32_0 = arith.constant 0 : i32
    %c0_i32_1 = arith.constant 0 : i32
    return %c0_i32, %c0_i32_0 : i32, i32
  }
  func.func @transform_4(%arg0: i32) -> (i32, i32) {
    %c0_i32 = arith.constant 0 : i32
    %c0_i32_0 = arith.constant 0 : i32
    %c0_i32_1 = arith.constant 0 : i32
    return %c0_i32, %c0_i32_0 : i32, i32
  }
  func.func @transform_5(%arg0: i32) -> (i32, i32) {
    %c0_i32 = arith.constant 0 : i32
    %c0_i32_0 = arith.constant 0 : i32
    %c0_i32_1 = arith.constant 0 : i32
    return %c0_i32, %c0_i32_0 : i32, i32
  }
  func.func @transform_6(%arg0: i32) -> (i32, i32) {
    %c0_i32 = arith.constant 0 : i32
    %c0_i32_0 = arith.constant 0 : i32
    %c0_i32_1 = arith.constant 0 : i32
    return %c0_i32, %c0_i32_0 : i32, i32
  }
  func.func @transform_7(%arg0: i32) -> (i32, i32) {
    %c0_i32 = arith.constant 0 : i32
    %c0_i32_0 = arith.constant 0 : i32
    %c0_i32_1 = arith.constant 0 : i32
    return %c0_i32, %c0_i32_0 : i32, i32
  }
  func.func @transform_8(%arg0: i32) -> (i32, i32) {
    %c0_i32 = arith.constant 0 : i32
    %c0_i32_0 = arith.constant 0 : i32
    %c0_i32_1 = arith.constant 0 : i32
    return %c0_i32, %c0_i32_0 : i32, i32
  }
  func.func @transform_9(%arg0: i32) -> (i32, i32) {
    %c0_i32 = arith.constant 0 : i32
    %c0_i32_0 = arith.constant 0 : i32
    %c0_i32_1 = arith.constant 0 : i32
    return %c0_i32, %c0_i32_0 : i32, i32
  }
  func.func @transform_10(%arg0: i32) -> (i32, i32) {
    %c0_i32 = arith.constant 0 : i32
    %c0_i32_0 = arith.constant 0 : i32
    %c0_i32_1 = arith.constant 0 : i32
    return %c0_i32, %c0_i32_0 : i32, i32
  }
  func.func @transform_11(%arg0: i32) -> (i32, i32) {
    %c0_i32 = arith.constant 0 : i32
    %c0_i32_0 = arith.constant 0 : i32
    %c0_i32_1 = arith.constant 0 : i32
    return %c0_i32, %c0_i32_0 : i32, i32
  }
  func.func @transform_12(%arg0: i32) -> (i32, i32) {
    %c0_i32 = arith.constant 0 : i32
    %c0_i32_0 = arith.constant 0 : i32
    %c0_i32_1 = arith.constant 0 : i32
    return %c0_i32, %c0_i32_0 : i32, i32
  }
  func.func @transform_13(%arg0: i32) -> (i32, i32) {
    %c0_i32 = arith.constant 0 : i32
    %c0_i32_0 = arith.constant 0 : i32
    return %c0_i32, %arg0 : i32, i32
  }
}

</mosaic_0001>

<llo_original>
// kernel: _eassfem_forward_impl.3
$region0: #{_eassfem_forward_impl.3}
  #allocation0 [shape = 'u32[]', space=smem, size = 0x4, offset = 0x4, fixed_abs, tag = 'smem constant byte address 0x4 - core index']
  #allocation1 [shape = 'u32[72,128]{1,0:T(1,128)}', space=vmem, size = 0x9000, scoped, tag = 'internal scratch']
  %s0 = inlined_call_operand.vmem [shape: f32[16,512], index: 0, kind: input, shape index: {}]
  %s1 = inlined_call_operand.vmem [shape: f32[16,16], index: 1, kind: input, shape index: {}]
  %s2 = inlined_call_operand.vmem [shape: f32[16,1], index: 2, kind: input, shape index: {}]
  %s3 = inlined_call_operand.vmem [shape: f32[1,16,1], index: 3, kind: output, shape index: {0}]
  %s4 = inlined_call_operand.vmem [shape: f32[1,16,1], index: 4, kind: output, shape index: {1}]
  %5 = xla_tuple %s3, %s4
  %s6 = sld [smem:[#allocation0]]
  $region30: #{_eassfem_forward_impl.3} parent=0
    _
  %s8 = ssub.s32 1, %s6
  %s9 = scalar_select 0, %s8, %s6
  // Predicated region
  $region2: #{_eassfem_forward_impl.3} parent=0 // pred_check
    _
  $region3: #{_eassfem_forward_impl.3} parent=0 // pred_check_branch
    %11 = sbr.rel (0) target = $region5
  $region4: #{_eassfem_forward_impl.3} parent=0 // pred_region
    _
  $region5: #{_eassfem_forward_impl.3} parent=0 // pred_fallthru
    _
  // Predicated region
  $region6: #{_eassfem_forward_impl.3} parent=0 // pred_check
    _
  $region7: #{_eassfem_forward_impl.3} parent=0 // pred_check_branch
    %13 = sbr.rel (0) target = $region9
  $region8: #{_eassfem_forward_impl.3} parent=0 // pred_region
    _
  $region9: #{_eassfem_forward_impl.3} parent=0 // pred_fallthru
    _
  // Predicated region
  $region10: #{_eassfem_forward_impl.3} parent=0 // pred_check
    _
  $region11: #{_eassfem_forward_impl.3} parent=0 // pred_check_branch
    %15 = sbr.rel (0) target = $region13
  $region12: #{_eassfem_forward_impl.3} parent=0 // pred_region
    _
  $region13: #{_eassfem_forward_impl.3} parent=0 // pred_fallthru
    _
  %v16 = vld [vmem:[%s0] sm:$0xff]
  %v17 = vld [vmem:[%s0 + $0x8] sm:$0xff]
  %v18 = vld [vmem:[%s0 + $0x10] sm:$0xff]
  %v19 = vld [vmem:[%s0 + $0x18] sm:$0xff]
  %v20 = vld [vmem:[%s0 + $0x20] sm:$0xff]
  %v21 = vld [vmem:[%s0 + $0x28] sm:$0xff]
  %v22 = vld [vmem:[%s0 + $0x30] sm:$0xff]
  %v23 = vld [vmem:[%s0 + $0x38] sm:$0xff]
  %v24 = vld [vmem:[%s1] sm:$0xff]
  %v25 = vld [vmem:[%s1 + $0x8] sm:$0xff]
  %v26 = vld [vmem:[%s2] sm:$0xff]
  %v27 = vld [vmem:[%s2 + $0x8] sm:$0xff]
  %29 = vset.pattern.permute.xlu0 0
  %30 = vperm.xlu0 %29, %v26
  %v31 = vpop.permute.xlu0 %30
  %34 = vset.pattern.permute.xlu0 0
  %35 = vperm.xlu0 %34, %v27
  %v36 = vpop.permute.xlu0 %35
  %vm38 = vcmask 130048
  %v40 = vsel %vm38, %v24, 0
  %v43 = vsel %vm38, %v25, 0
  %45 = vmatpush.msra.mxu0 0.0
  %46 = vmatpush.msra.mxu0 0.0
  %47 = vmatpush.msra.mxu0 0.0
  %48 = vmatpush.msra.mxu0 0.0
  %49 = vmatpush.msra.mxu0 0.0
  %50 = vmatpush.msra.mxu0 0.0
  %51 = vmatpush.msra.mxu0 0.0
  %52 = vmatpush.msra.mxu0 0.0
  %53 = vmatpush.msra.mxu0 0.0
  %54 = vmatpush.msra.mxu0 0.0
  %55 = vmatpush.msra.mxu0 0.0
  %56 = vmatpush.msra.mxu0 0.0
  %57 = vmatpush.msra.mxu0 0.0
  %58 = vmatpush.msra.mxu0 0.0
  %59 = vmatpush.msra.mxu0 %v20
  %60 = vmatpush.msra.mxu0 %v16
  %61 = vmatmul.f32.gmra.mxu0 %v40
  %v62 = vpop.f32.mrf.mxu0
  %v63 = vadd.f32 %v31, %v62
  %64 = vmatmul.f32.gmra.mxu0 %v43
  %v65 = vpop.f32.mrf.mxu0
  %v66 = vadd.f32 %v36, %v65
  %67 = vdwg.mxu0
  %68 = vmatpush.msra.mxu0 0.0
  %69 = vmatpush.msra.mxu0 0.0
  %70 = vmatpush.msra.mxu0 0.0
  %71 = vmatpush.msra.mxu0 0.0
  %72 = vmatpush.msra.mxu0 0.0
  %73 = vmatpush.msra.mxu0 0.0
  %74 = vmatpush.msra.mxu0 0.0
  %75 = vmatpush.msra.mxu0 0.0
  %76 = vmatpush.msra.mxu0 0.0
  %77 = vmatpush.msra.mxu0 0.0
  %78 = vmatpush.msra.mxu0 0.0
  %79 = vmatpush.msra.mxu0 0.0
  %80 = vmatpush.msra.mxu0 0.0
  %81 = vmatpush.msra.mxu0 0.0
  %82 = vmatpush.msra.mxu0 %v21
  %83 = vmatpush.msra.mxu0 %v17
  %84 = vmatmul.f32.gmra.mxu0 %v40
  %v85 = vpop.f32.mrf.mxu0
  %v86 = vadd.f32 %v31, %v85
  %87 = vmatmul.f32.gmra.mxu0 %v43
  %v88 = vpop.f32.mrf.mxu0
  %v89 = vadd.f32 %v36, %v88
  %90 = vdwg.mxu0
  %91 = vmatpush.msra.mxu0 0.0
  %92 = vmatpush.msra.mxu0 0.0
  %93 = vmatpush.msra.mxu0 0.0
  %94 = vmatpush.msra.mxu0 0.0
  %95 = vmatpush.msra.mxu0 0.0
  %96 = vmatpush.msra.mxu0 0.0
  %97 = vmatpush.msra.mxu0 0.0
  %98 = vmatpush.msra.mxu0 0.0
  %99 = vmatpush.msra.mxu0 0.0
  %100 = vmatpush.msra.mxu0 0.0
  %101 = vmatpush.msra.mxu0 0.0
  %102 = vmatpush.msra.mxu0 0.0
  %103 = vmatpush.msra.mxu0 0.0
  %104 = vmatpush.msra.mxu0 0.0
  %105 = vmatpush.msra.mxu0 %v22
  %106 = vmatpush.msra.mxu0 %v18
  %107 = vmatmul.f32.gmra.mxu0 %v40
  %v108 = vpop.f32.mrf.mxu0
  %v109 = vadd.f32 %v31, %v108
  %110 = vmatmul.f32.gmra.mxu0 %v43
  %v111 = vpop.f32.mrf.mxu0
  %v112 = vadd.f32 %v36, %v111
  %113 = vdwg.mxu0
  %114 = vmatpush.msra.mxu0 0.0
  %115 = vmatpush.msra.mxu0 0.0
  %116 = vmatpush.msra.mxu0 0.0
  %117 = vmatpush.msra.mxu0 0.0
  %118 = vmatpush.msra.mxu0 0.0
  %119 = vmatpush.msra.mxu0 0.0
  %120 = vmatpush.msra.mxu0 0.0
  %121 = vmatpush.msra.mxu0 0.0
  %122 = vmatpush.msra.mxu0 0.0
  %123 = vmatpush.msra.mxu0 0.0
  %124 = vmatpush.msra.mxu0 0.0
  %125 = vmatpush.msra.mxu0 0.0
  %126 = vmatpush.msra.mxu0 0.0
  %127 = vmatpush.msra.mxu0 0.0
  %128 = vmatpush.msra.mxu0 %v23
  %129 = vmatpush.msra.mxu0 %v19
  %130 = vmatmul.f32.gmra.mxu0 %v40
  %v131 = vpop.f32.mrf.mxu0
  %v132 = vadd.f32 %v31, %v131
  %133 = vmatmul.f32.gmra.mxu0 %v43
  %v134 = vpop.f32.mrf.mxu0
  %v135 = vadd.f32 %v36, %v134
  %136 = vdwg.mxu0
  %v137 = vadd.f32 %v63, %v16
  %v138 = vadd.f32 %v86, %v17
  %v139 = vadd.f32 %v109, %v18
  %v140 = vadd.f32 %v132, %v19
  %v141 = vadd.f32 %v66, %v20
  %v142 = vadd.f32 %v89, %v21
  %v143 = vadd.f32 %v112, %v22
  %v144 = vadd.f32 %v135, %v23
  %v145 = vadd.f32 %v137, %v138
  %v146 = vadd.f32 %v145, %v139
  %v147 = vadd.f32 %v146, %v140
  %148 = vadd.xlane.f32.xlu0 %v147
  %v149 = vpop.xlane.xlu0 %148
  %v150 = vadd.f32 %v141, %v142
  %v151 = vadd.f32 %v150, %v143
  %v152 = vadd.f32 %v151, %v144
  %153 = vadd.xlane.f32.xlu0 %v152
  %v154 = vpop.xlane.xlu0 %153
  %vm155 = vcmask 7168
  %156 = vst.msk [vmem:[%s3] sm:$0xff] %vm155, %v149
  %157 = vst.msk [vmem:[%s3 + $0x8] sm:$0xff] %vm155, %v154
  %v158 = vmul.f32 %v137, %v137
  %v159 = vmul.f32 %v138, %v138
  %v160 = vmul.f32 %v139, %v139
  %v161 = vmul.f32 %v140, %v140
  %v162 = vmul.f32 %v141, %v141
  %v163 = vmul.f32 %v142, %v142
  %v164 = vmul.f32 %v143, %v143
  %v165 = vmul.f32 %v144, %v144
  %v166 = vadd.f32 %v158, %v159
  %v167 = vadd.f32 %v166, %v160
  %v168 = vadd.f32 %v167, %v161
  %169 = vadd.xlane.f32.xlu0 %v168
  %v170 = vpop.xlane.xlu0 %169
  %v171 = vadd.f32 %v162, %v163
  %v172 = vadd.f32 %v171, %v164
  %v173 = vadd.f32 %v172, %v165
  %174 = vadd.xlane.f32.xlu0 %v173
  %v175 = vpop.xlane.xlu0 %174
  %176 = vst.msk [vmem:[%s4] sm:$0xff] %vm155, %v170
  %177 = vst.msk [vmem:[%s4 + $0x8] sm:$0xff] %vm155, %v175
  // Predicated region
  $region14: #{_eassfem_forward_impl.3} parent=0 // pred_check
    _
  $region15: #{_eassfem_forward_impl.3} parent=0 // pred_check_branch
    %179 = sbr.rel (0) target = $region17
  $region16: #{_eassfem_forward_impl.3} parent=0 // pred_region
    _
  $region17: #{_eassfem_forward_impl.3} parent=0 // pred_fallthru
    _
  // Predicated region
  $region18: #{_eassfem_forward_impl.3} parent=0 // pred_check
    _
  $region19: #{_eassfem_forward_impl.3} parent=0 // pred_check_branch
    %181 = sbr.rel (0) target = $region21
  $region20: #{_eassfem_forward_impl.3} parent=0 // pred_region
    _
  $region21: #{_eassfem_forward_impl.3} parent=0 // pred_fallthru
    _
  // Predicated region
  $region22: #{_eassfem_forward_impl.3} parent=0 // pred_check
    _
  $region23: #{_eassfem_forward_impl.3} parent=0 // pred_check_branch
    %183 = sbr.rel (0) target = $region25
  $region24: #{_eassfem_forward_impl.3} parent=0 // pred_region
    _
  $region25: #{_eassfem_forward_impl.3} parent=0 // pred_fallthru
    _
  // Predicated region
  $region26: #{_eassfem_forward_impl.3} parent=0 // pred_check
    _
  $region27: #{_eassfem_forward_impl.3} parent=0 // pred_check_branch
    %185 = sbr.rel (0) target = $region29
  $region28: #{_eassfem_forward_impl.3} parent=0 // pred_region
    _
  $region29: #{_eassfem_forward_impl.3} parent=0 // pred_fallthru
    _

// kernel: _eassfem_forward_impl.4
$region0: #{_eassfem_forward_impl.4}
  #allocation0 [shape = 'u32[]', space=smem, size = 0x4, offset = 0x4, fixed_abs, tag = 'smem constant byte address 0x4 - core index']
  #allocation1 [shape = 'u32[72,128]{1,0:T(1,128)}', space=vmem, size = 0x9000, scoped, tag = 'internal scratch']
  %s0 = inlined_call_operand.vmem [shape: f32[16,512], index: 0, kind: input, shape index: {}]
  %s1 = inlined_call_operand.vmem [shape: f32[16,16], index: 1, kind: input, shape index: {}]
  %s2 = inlined_call_operand.vmem [shape: f32[16,1], index: 2, kind: input, shape index: {}]
  %s3 = inlined_call_operand.vmem [shape: f32[16,16], index: 3, kind: input, shape index: {}]
  %s4 = inlined_call_operand.vmem [shape: f32[16,1], index: 4, kind: input, shape index: {}]
  %s5 = inlined_call_operand.vmem [shape: f32[16,1], index: 5, kind: input, shape index: {}]
  %s6 = inlined_call_operand.vmem [shape: f32[16,1], index: 6, kind: input, shape index: {}]
  %s7 = inlined_call_operand.vmem [shape: f32[1,16,1], index: 7, kind: output, shape index: {0}]
  %s8 = inlined_call_operand.vmem [shape: f32[1,16,1], index: 8, kind: output, shape index: {1}]
  %9 = xla_tuple %s7, %s8
  %s10 = sld [smem:[#allocation0]]
  $region46: #{_eassfem_forward_impl.4} parent=0
    _
  %s12 = ssub.s32 1, %s10
  %s13 = scalar_select 0, %s12, %s10
  // Predicated region
  $region2: #{_eassfem_forward_impl.4} parent=0 // pred_check
    _
  $region3: #{_eassfem_forward_impl.4} parent=0 // pred_check_branch
    %15 = sbr.rel (0) target = $region5
  $region4: #{_eassfem_forward_impl.4} parent=0 // pred_region
    _
  $region5: #{_eassfem_forward_impl.4} parent=0 // pred_fallthru
    _
  // Predicated region
  $region6: #{_eassfem_forward_impl.4} parent=0 // pred_check
    _
  $region7: #{_eassfem_forward_impl.4} parent=0 // pred_check_branch
    %17 = sbr.rel (0) target = $region9
  $region8: #{_eassfem_forward_impl.4} parent=0 // pred_region
    _
  $region9: #{_eassfem_forward_impl.4} parent=0 // pred_fallthru
    _
  // Predicated region
  $region10: #{_eassfem_forward_impl.4} parent=0 // pred_check
    _
  $region11: #{_eassfem_forward_impl.4} parent=0 // pred_check_branch
    %19 = sbr.rel (0) target = $region13
  $region12: #{_eassfem_forward_impl.4} parent=0 // pred_region
    _
  $region13: #{_eassfem_forward_impl.4} parent=0 // pred_fallthru
    _
  // Predicated region
  $region14: #{_eassfem_forward_impl.4} parent=0 // pred_check
    _
  $region15: #{_eassfem_forward_impl.4} parent=0 // pred_check_branch
    %21 = sbr.rel (0) target = $region17
  $region16: #{_eassfem_forward_impl.4} parent=0 // pred_region
    _
  $region17: #{_eassfem_forward_impl.4} parent=0 // pred_fallthru
    _
  // Predicated region
  $region18: #{_eassfem_forward_impl.4} parent=0 // pred_check
    _
  $region19: #{_eassfem_forward_impl.4} parent=0 // pred_check_branch
    %23 = sbr.rel (0) target = $region21
  $region20: #{_eassfem_forward_impl.4} parent=0 // pred_region
    _
  $region21: #{_eassfem_forward_impl.4} parent=0 // pred_fallthru
    _
  // Predicated region
  $region22: #{_eassfem_forward_impl.4} parent=0 // pred_check
    _
  $region23: #{_eassfem_forward_impl.4} parent=0 // pred_check_branch
    %25 = sbr.rel (0) target = $region25
  $region24: #{_eassfem_forward_impl.4} parent=0 // pred_region
    _
  $region25: #{_eassfem_forward_impl.4} parent=0 // pred_fallthru
    _
  // Predicated region
  $region26: #{_eassfem_forward_impl.4} parent=0 // pred_check
    _
  $region27: #{_eassfem_forward_impl.4} parent=0 // pred_check_branch
    %27 = sbr.rel (0) target = $region29
  $region28: #{_eassfem_forward_impl.4} parent=0 // pred_region
    _
  $region29: #{_eassfem_forward_impl.4} parent=0 // pred_fallthru
    _
  %v28 = vld [vmem:[%s0] sm:$0xff]
  %v29 = vld [vmem:[%s0 + $0x8] sm:$0xff]
  %v30 = vld [vmem:[%s0 + $0x10] sm:$0xff]
  %v31 = vld [vmem:[%s0 + $0x18] sm:$0xff]
  %v32 = vld [vmem:[%s0 + $0x20] sm:$0xff]
  %v33 = vld [vmem:[%s0 + $0x28] sm:$0xff]
  %v34 = vld [vmem:[%s0 + $0x30] sm:$0xff]
  %v35 = vld [vmem:[%s0 + $0x38] sm:$0xff]
  %v36 = vld [vmem:[%s1] sm:$0xff]
  %v37 = vld [vmem:[%s1 + $0x8] sm:$0xff]
  %v38 = vld [vmem:[%s2] sm:$0xff]
  %v39 = vld [vmem:[%s2 + $0x8] sm:$0xff]
  %41 = vset.pattern.permute.xlu0 0
  %42 = vperm.xlu0 %41, %v38
  %v43 = vpop.permute.xlu0 %42
  %46 = vset.pattern.permute.xlu0 0
  %47 = vperm.xlu0 %46, %v39
  %v48 = vpop.permute.xlu0 %47
  %vm50 = vcmask 130048
  %v52 = vsel %vm50, %v36, 0
  %v55 = vsel %vm50, %v37, 0
  %57 = vmatpush.msra.mxu0 0.0
  %58 = vmatpush.msra.mxu0 0.0
  %59 = vmatpush.msra.mxu0 0.0
  %60 = vmatpush.msra.mxu0 0.0
  %61 = vmatpush.msra.mxu0 0.0
  %62 = vmatpush.msra.mxu0 0.0
  %63 = vmatpush.msra.mxu0 0.0
  %64 = vmatpush.msra.mxu0 0.0
  %65 = vmatpush.msra.mxu0 0.0
  %66 = vmatpush.msra.mxu0 0.0
  %67 = vmatpush.msra.mxu0 0.0
  %68 = vmatpush.msra.mxu0 0.0
  %69 = vmatpush.msra.mxu0 0.0
  %70 = vmatpush.msra.mxu0 0.0
  %71 = vmatpush.msra.mxu0 %v32
  %72 = vmatpush.msra.mxu0 %v28
  %73 = vmatmul.f32.gmra.mxu0 %v52
  %v74 = vpop.f32.mrf.mxu0
  %v75 = vadd.f32 %v43, %v74
  %76 = vmatmul.f32.gmra.mxu0 %v55
  %v77 = vpop.f32.mrf.mxu0
  %v78 = vadd.f32 %v48, %v77
  %79 = vdwg.mxu0
  %80 = vmatpush.msra.mxu0 0.0
  %81 = vmatpush.msra.mxu0 0.0
  %82 = vmatpush.msra.mxu0 0.0
  %83 = vmatpush.msra.mxu0 0.0
  %84 = vmatpush.msra.mxu0 0.0
  %85 = vmatpush.msra.mxu0 0.0
  %86 = vmatpush.msra.mxu0 0.0
  %87 = vmatpush.msra.mxu0 0.0
  %88 = vmatpush.msra.mxu0 0.0
  %89 = vmatpush.msra.mxu0 0.0
  %90 = vmatpush.msra.mxu0 0.0
  %91 = vmatpush.msra.mxu0 0.0
  %92 = vmatpush.msra.mxu0 0.0
  %93 = vmatpush.msra.mxu0 0.0
  %94 = vmatpush.msra.mxu0 %v33
  %95 = vmatpush.msra.mxu0 %v29
  %96 = vmatmul.f32.gmra.mxu0 %v52
  %v97 = vpop.f32.mrf.mxu0
  %v98 = vadd.f32 %v43, %v97
  %99 = vmatmul.f32.gmra.mxu0 %v55
  %v100 = vpop.f32.mrf.mxu0
  %v101 = vadd.f32 %v48, %v100
  %102 = vdwg.mxu0
  %103 = vmatpush.msra.mxu0 0.0
  %104 = vmatpush.msra.mxu0 0.0
  %105 = vmatpush.msra.mxu0 0.0
  %106 = vmatpush.msra.mxu0 0.0
  %107 = vmatpush.msra.mxu0 0.0
  %108 = vmatpush.msra.mxu0 0.0
  %109 = vmatpush.msra.mxu0 0.0
  %110 = vmatpush.msra.mxu0 0.0
  %111 = vmatpush.msra.mxu0 0.0
  %112 = vmatpush.msra.mxu0 0.0
  %113 = vmatpush.msra.mxu0 0.0
  %114 = vmatpush.msra.mxu0 0.0
  %115 = vmatpush.msra.mxu0 0.0
  %116 = vmatpush.msra.mxu0 0.0
  %117 = vmatpush.msra.mxu0 %v34
  %118 = vmatpush.msra.mxu0 %v30
  %119 = vmatmul.f32.gmra.mxu0 %v52
  %v120 = vpop.f32.mrf.mxu0
  %v121 = vadd.f32 %v43, %v120
  %122 = vmatmul.f32.gmra.mxu0 %v55
  %v123 = vpop.f32.mrf.mxu0
  %v124 = vadd.f32 %v48, %v123
  %125 = vdwg.mxu0
  %126 = vmatpush.msra.mxu0 0.0
  %127 = vmatpush.msra.mxu0 0.0
  %128 = vmatpush.msra.mxu0 0.0
  %129 = vmatpush.msra.mxu0 0.0
  %130 = vmatpush.msra.mxu0 0.0
  %131 = vmatpush.msra.mxu0 0.0
  %132 = vmatpush.msra.mxu0 0.0
  %133 = vmatpush.msra.mxu0 0.0
  %134 = vmatpush.msra.mxu0 0.0
  %135 = vmatpush.msra.mxu0 0.0
  %136 = vmatpush.msra.mxu0 0.0
  %137 = vmatpush.msra.mxu0 0.0
  %138 = vmatpush.msra.mxu0 0.0
  %139 = vmatpush.msra.mxu0 0.0
  %140 = vmatpush.msra.mxu0 %v35
  %141 = vmatpush.msra.mxu0 %v31
  %142 = vmatmul.f32.gmra.mxu0 %v52
  %v143 = vpop.f32.mrf.mxu0
  %v144 = vadd.f32 %v43, %v143
  %145 = vmatmul.f32.gmra.mxu0 %v55
  %v146 = vpop.f32.mrf.mxu0
  %v147 = vadd.f32 %v48, %v146
  %148 = vdwg.mxu0
  %v149 = vadd.f32 %v75, %v28
  %v150 = vadd.f32 %v98, %v29
  %v151 = vadd.f32 %v121, %v30
  %v152 = vadd.f32 %v144, %v31
  %v153 = vadd.f32 %v78, %v32
  %v154 = vadd.f32 %v101, %v33
  %v155 = vadd.f32 %v124, %v34
  %v156 = vadd.f32 %v147, %v35
  %v157 = vld [vmem:[%s5] sm:$0xff]
  %v158 = vld [vmem:[%s5 + $0x8] sm:$0xff]
  %160 = vset.pattern.permute.xlu0 0
  %161 = vperm.xlu0 %160, %v157
  %v162 = vpop.permute.xlu0 %161
  %165 = vset.pattern.permute.xlu0 0
  %166 = vperm.xlu0 %165, %v158
  %v167 = vpop.permute.xlu0 %166
  %v169 = vmul.f32 %v149, %v162
  %v170 = vmul.f32 %v150, %v162
  %v171 = vmul.f32 %v151, %v162
  %v172 = vmul.f32 %v152, %v162
  %v173 = vmul.f32 %v153, %v167
  %v174 = vmul.f32 %v154, %v167
  %v175 = vmul.f32 %v155, %v167
  %v176 = vmul.f32 %v156, %v167
  %v177 = vld [vmem:[%s6] sm:$0xff]
  %v178 = vld [vmem:[%s6 + $0x8] sm:$0xff]
  %180 = vset.pattern.permute.xlu0 0
  %181 = vperm.xlu0 %180, %v177
  %v182 = vpop.permute.xlu0 %181
  %185 = vset.pattern.permute.xlu0 0
  %186 = vperm.xlu0 %185, %v178
  %v187 = vpop.permute.xlu0 %186
  %v189 = vadd.f32 %v169, %v182
  %v190 = vadd.f32 %v170, %v182
  %v191 = vadd.f32 %v171, %v182
  %v192 = vadd.f32 %v172, %v182
  %v193 = vadd.f32 %v173, %v187
  %v194 = vadd.f32 %v174, %v187
  %v195 = vadd.f32 %v175, %v187
  %v196 = vadd.f32 %v176, %v187
  %v197 = vld [vmem:[%s3] sm:$0xff]
  %v198 = vld [vmem:[%s3 + $0x8] sm:$0xff]
  %v199 = vld [vmem:[%s4] sm:$0xff]
  %v200 = vld [vmem:[%s4 + $0x8] sm:$0xff]
  %202 = vset.pattern.permute.xlu0 0
  %203 = vperm.xlu0 %202, %v199
  %v204 = vpop.permute.xlu0 %203
  %207 = vset.pattern.permute.xlu0 0
  %208 = vperm.xlu0 %207, %v200
  %v209 = vpop.permute.xlu0 %208
  %v212 = vsel %vm50, %v197, 0
  %v215 = vsel %vm50, %v198, 0
  %217 = vmatpush.msra.mxu0 0.0
  %218 = vmatpush.msra.mxu0 0.0
  %219 = vmatpush.msra.mxu0 0.0
  %220 = vmatpush.msra.mxu0 0.0
  %221 = vmatpush.msra.mxu0 0.0
  %222 = vmatpush.msra.mxu0 0.0
  %223 = vmatpush.msra.mxu0 0.0
  %224 = vmatpush.msra.mxu0 0.0
  %225 = vmatpush.msra.mxu0 0.0
  %226 = vmatpush.msra.mxu0 0.0
  %227 = vmatpush.msra.mxu0 0.0
  %228 = vmatpush.msra.mxu0 0.0
  %229 = vmatpush.msra.mxu0 0.0
  %230 = vmatpush.msra.mxu0 0.0
  %231 = vmatpush.msra.mxu0 %v193
  %232 = vmatpush.msra.mxu0 %v189
  %233 = vmatmul.f32.gmra.mxu0 %v212
  %v234 = vpop.f32.mrf.mxu0
  %v235 = vadd.f32 %v204, %v234
  %236 = vmatmul.f32.gmra.mxu0 %v215
  %v237 = vpop.f32.mrf.mxu0
  %v238 = vadd.f32 %v209, %v237
  %239 = vdwg.mxu0
  %240 = vmatpush.msra.mxu0 0.0
  %241 = vmatpush.msra.mxu0 0.0
  %242 = vmatpush.msra.mxu0 0.0
  %243 = vmatpush.msra.mxu0 0.0
  %244 = vmatpush.msra.mxu0 0.0
  %245 = vmatpush.msra.mxu0 0.0
  %246 = vmatpush.msra.mxu0 0.0
  %247 = vmatpush.msra.mxu0 0.0
  %248 = vmatpush.msra.mxu0 0.0
  %249 = vmatpush.msra.mxu0 0.0
  %250 = vmatpush.msra.mxu0 0.0
  %251 = vmatpush.msra.mxu0 0.0
  %252 = vmatpush.msra.mxu0 0.0
  %253 = vmatpush.msra.mxu0 0.0
  %254 = vmatpush.msra.mxu0 %v194
  %255 = vmatpush.msra.mxu0 %v190
  %256 = vmatmul.f32.gmra.mxu0 %v212
  %v257 = vpop.f32.mrf.mxu0
  %v258 = vadd.f32 %v204, %v257
  %259 = vmatmul.f32.gmra.mxu0 %v215
  %v260 = vpop.f32.mrf.mxu0
  %v261 = vadd.f32 %v209, %v260
  %262 = vdwg.mxu0
  %263 = vmatpush.msra.mxu0 0.0
  %264 = vmatpush.msra.mxu0 0.0
  %265 = vmatpush.msra.mxu0 0.0
  %266 = vmatpush.msra.mxu0 0.0
  %267 = vmatpush.msra.mxu0 0.0
  %268 = vmatpush.msra.mxu0 0.0
  %269 = vmatpush.msra.mxu0 0.0
  %270 = vmatpush.msra.mxu0 0.0
  %271 = vmatpush.msra.mxu0 0.0
  %272 = vmatpush.msra.mxu0 0.0
  %273 = vmatpush.msra.mxu0 0.0
  %274 = vmatpush.msra.mxu0 0.0
  %275 = vmatpush.msra.mxu0 0.0
  %276 = vmatpush.msra.mxu0 0.0
  %277 = vmatpush.msra.mxu0 %v195
  %278 = vmatpush.msra.mxu0 %v191
  %279 = vmatmul.f32.gmra.mxu0 %v212
  %v280 = vpop.f32.mrf.mxu0
  %v281 = vadd.f32 %v204, %v280
  %282 = vmatmul.f32.gmra.mxu0 %v215
  %v283 = vpop.f32.mrf.mxu0
  %v284 = vadd.f32 %v209, %v283
  %285 = vdwg.mxu0
  %286 = vmatpush.msra.mxu0 0.0
  %287 = vmatpush.msra.mxu0 0.0
  %288 = vmatpush.msra.mxu0 0.0
  %289 = vmatpush.msra.mxu0 0.0
  %290 = vmatpush.msra.mxu0 0.0
  %291 = vmatpush.msra.mxu0 0.0
  %292 = vmatpush.msra.mxu0 0.0
  %293 = vmatpush.msra.mxu0 0.0
  %294 = vmatpush.msra.mxu0 0.0
  %295 = vmatpush.msra.mxu0 0.0
  %296 = vmatpush.msra.mxu0 0.0
  %297 = vmatpush.msra.mxu0 0.0
  %298 = vmatpush.msra.mxu0 0.0
  %299 = vmatpush.msra.mxu0 0.0
  %300 = vmatpush.msra.mxu0 %v196
  %301 = vmatpush.msra.mxu0 %v192
  %302 = vmatmul.f32.gmra.mxu0 %v212
  %v303 = vpop.f32.mrf.mxu0
  %v304 = vadd.f32 %v204, %v303
  %305 = vmatmul.f32.gmra.mxu0 %v215
  %v306 = vpop.f32.mrf.mxu0
  %v307 = vadd.f32 %v209, %v306
  %308 = vdwg.mxu0
  %v309 = vadd.f32 %v189, %v235
  %v310 = vadd.f32 %v190, %v258
  %v311 = vadd.f32 %v191, %v281
  %v312 = vadd.f32 %v192, %v304
  %v313 = vadd.f32 %v193, %v238
  %v314 = vadd.f32 %v194, %v261
  %v315 = vadd.f32 %v195, %v284
  %v316 = vadd.f32 %v196, %v307
  %v317 = vadd.f32 %v309, %v149
  %v318 = vadd.f32 %v310, %v150
  %v319 = vadd.f32 %v311, %v151
  %v320 = vadd.f32 %v312, %v152
  %v321 = vadd.f32 %v313, %v153
  %v322 = vadd.f32 %v314, %v154
  %v323 = vadd.f32 %v315, %v155
  %v324 = vadd.f32 %v316, %v156
  %v325 = vadd.f32 %v317, %v318
  %v326 = vadd.f32 %v325, %v319
  %v327 = vadd.f32 %v326, %v320
  %328 = vadd.xlane.f32.xlu0 %v327
  %v329 = vpop.xlane.xlu0 %328
  %v330 = vadd.f32 %v321, %v322
  %v331 = vadd.f32 %v330, %v323
  %v332 = vadd.f32 %v331, %v324
  %333 = vadd.xlane.f32.xlu0 %v332
  %v334 = vpop.xlane.xlu0 %333
  %vm335 = vcmask 7168
  %336 = vst.msk [vmem:[%s7] sm:$0xff] %vm335, %v329
  %337 = vst.msk [vmem:[%s7 + $0x8] sm:$0xff] %vm335, %v334
  %v338 = vmul.f32 %v317, %v317
  %v339 = vmul.f32 %v318, %v318
  %v340 = vmul.f32 %v319, %v319
  %v341 = vmul.f32 %v320, %v320
  %v342 = vmul.f32 %v321, %v321
  %v343 = vmul.f32 %v322, %v322
  %v344 = vmul.f32 %v323, %v323
  %v345 = vmul.f32 %v324, %v324
  %v346 = vadd.f32 %v338, %v339
  %v347 = vadd.f32 %v346, %v340
  %v348 = vadd.f32 %v347, %v341
  %349 = vadd.xlane.f32.xlu0 %v348
  %v350 = vpop.xlane.xlu0 %349
  %v351 = vadd.f32 %v342, %v343
  %v352 = vadd.f32 %v351, %v344
  %v353 = vadd.f32 %v352, %v345
  %354 = vadd.xlane.f32.xlu0 %v353
  %v355 = vpop.xlane.xlu0 %354
  %356 = vst.msk [vmem:[%s8] sm:$0xff] %vm335, %v350
  %357 = vst.msk [vmem:[%s8 + $0x8] sm:$0xff] %vm335, %v355
  // Predicated region
  $region30: #{_eassfem_forward_impl.4} parent=0 // pred_check
    _
  $region31: #{_eassfem_forward_impl.4} parent=0 // pred_check_branch
    %359 = sbr.rel (0) target = $region33
  $region32: #{_eassfem_forward_impl.4} parent=0 // pred_region
    _
  $region33: #{_eassfem_forward_impl.4} parent=0 // pred_fallthru
    _
  // Predicated region
  $region34: #{_eassfem_forward_impl.4} parent=0 // pred_check
    _
  $region35: #{_eassfem_forward_impl.4} parent=0 // pred_check_branch
    %361 = sbr.rel (0) target = $region37
  $region36: #{_eassfem_forward_impl.4} parent=0 // pred_region
    _
  $region37: #{_eassfem_forward_impl.4} parent=0 // pred_fallthru
    _
  // Predicated region
  $region38: #{_eassfem_forward_impl.4} parent=0 // pred_check
    _
  $region39: #{_eassfem_forward_impl.4} parent=0 // pred_check_branch
    %363 = sbr.rel (0) target = $region41
  $region40: #{_eassfem_forward_impl.4} parent=0 // pred_region
    _
  $region41: #{_eassfem_forward_impl.4} parent=0 // pred_fallthru
    _
  // Predicated region
  $region42: #{_eassfem_forward_impl.4} parent=0 // pred_check
    _
  $region43: #{_eassfem_forward_impl.4} parent=0 // pred_check_branch
    %365 = sbr.rel (0) target = $region45
  $region44: #{_eassfem_forward_impl.4} parent=0 // pred_region
    _
  $region45: #{_eassfem_forward_impl.4} parent=0 // pred_fallthru
    _

// kernel: _eassfem_forward_impl.5
$region0: #{_eassfem_forward_impl.5}
  #allocation0 [shape = 'u32[]', space=smem, size = 0x4, offset = 0x4, fixed_abs, tag = 'smem constant byte address 0x4 - core index']
  #allocation1 [shape = 'u32[72,128]{1,0:T(1,128)}', space=vmem, size = 0x9000, scoped, tag = 'internal scratch']
  %s0 = inlined_call_operand.vmem [shape: f32[16,512], index: 0, kind: input, shape index: {}]
  %s1 = inlined_call_operand.vmem [shape: f32[16,16], index: 1, kind: input, shape index: {}]
  %s2 = inlined_call_operand.vmem [shape: f32[16,1], index: 2, kind: input, shape index: {}]
  %s3 = inlined_call_operand.vmem [shape: f32[16,16], index: 3, kind: input, shape index: {}]
  %s4 = inlined_call_operand.vmem [shape: f32[16,1], index: 4, kind: input, shape index: {}]
  %s5 = inlined_call_operand.vmem [shape: f32[16,16], index: 5, kind: input, shape index: {}]
  %s6 = inlined_call_operand.vmem [shape: f32[16,1], index: 6, kind: input, shape index: {}]
  %s7 = inlined_call_operand.vmem [shape: f32[16,16], index: 7, kind: input, shape index: {}]
  %s8 = inlined_call_operand.vmem [shape: f32[16,1], index: 8, kind: input, shape index: {}]
  %s9 = inlined_call_operand.vmem [shape: f32[16,1], index: 9, kind: input, shape index: {}]
  %s10 = inlined_call_operand.vmem [shape: f32[16,1], index: 10, kind: input, shape index: {}]
  %s11 = inlined_call_operand.vmem [shape: f32[16,1], index: 11, kind: input, shape index: {}]
  %s12 = inlined_call_operand.vmem [shape: f32[16,1], index: 12, kind: input, shape index: {}]
  %s13 = inlined_call_operand.vmem [shape: f32[16,512], index: 13, kind: output, shape index: {}]
  %s14 = sld [smem:[#allocation0]]
  $region62: #{_eassfem_forward_impl.5} parent=0
    _
  %s16 = ssub.s32 1, %s14
  %s17 = scalar_select 0, %s16, %s14
  // Predicated region
  $region2: #{_eassfem_forward_impl.5} parent=0 // pred_check
    _
  $region3: #{_eassfem_forward_impl.5} parent=0 // pred_check_branch
    %19 = sbr.rel (0) target = $region5
  $region4: #{_eassfem_forward_impl.5} parent=0 // pred_region
    _
  $region5: #{_eassfem_forward_impl.5} parent=0 // pred_fallthru
    _
  // Predicated region
  $region6: #{_eassfem_forward_impl.5} parent=0 // pred_check
    _
  $region7: #{_eassfem_forward_impl.5} parent=0 // pred_check_branch
    %21 = sbr.rel (0) target = $region9
  $region8: #{_eassfem_forward_impl.5} parent=0 // pred_region
    _
  $region9: #{_eassfem_forward_impl.5} parent=0 // pred_fallthru
    _
  // Predicated region
  $region10: #{_eassfem_forward_impl.5} parent=0 // pred_check
    _
  $region11: #{_eassfem_forward_impl.5} parent=0 // pred_check_branch
    %23 = sbr.rel (0) target = $region13
  $region12: #{_eassfem_forward_impl.5} parent=0 // pred_region
    _
  $region13: #{_eassfem_forward_impl.5} parent=0 // pred_fallthru
    _
  // Predicated region
  $region14: #{_eassfem_forward_impl.5} parent=0 // pred_check
    _
  $region15: #{_eassfem_forward_impl.5} parent=0 // pred_check_branch
    %25 = sbr.rel (0) target = $region17
  $region16: #{_eassfem_forward_impl.5} parent=0 // pred_region
    _
  $region17: #{_eassfem_forward_impl.5} parent=0 // pred_fallthru
    _
  // Predicated region
  $region18: #{_eassfem_forward_impl.5} parent=0 // pred_check
    _
  $region19: #{_eassfem_forward_impl.5} parent=0 // pred_check_branch
    %27 = sbr.rel (0) target = $region21
  $region20: #{_eassfem_forward_impl.5} parent=0 // pred_region
    _
  $region21: #{_eassfem_forward_impl.5} parent=0 // pred_fallthru
    _
  // Predicated region
  $region22: #{_eassfem_forward_impl.5} parent=0 // pred_check
    _
  $region23: #{_eassfem_forward_impl.5} parent=0 // pred_check_branch
    %29 = sbr.rel (0) target = $region25
  $region24: #{_eassfem_forward_impl.5} parent=0 // pred_region
    _
  $region25: #{_eassfem_forward_impl.5} parent=0 // pred_fallthru
    _
  // Predicated region
  $region26: #{_eassfem_forward_impl.5} parent=0 // pred_check
    _
  $region27: #{_eassfem_forward_impl.5} parent=0 // pred_check_branch
    %31 = sbr.rel (0) target = $region29
  $region28: #{_eassfem_forward_impl.5} parent=0 // pred_region
    _
  $region29: #{_eassfem_forward_impl.5} parent=0 // pred_fallthru
    _
  // Predicated region
  $region30: #{_eassfem_forward_impl.5} parent=0 // pred_check
    _
  $region31: #{_eassfem_forward_impl.5} parent=0 // pred_check_branch
    %33 = sbr.rel (0) target = $region33
  $region32: #{_eassfem_forward_impl.5} parent=0 // pred_region
    _
  $region33: #{_eassfem_forward_impl.5} parent=0 // pred_fallthru
    _
  // Predicated region
  $region34: #{_eassfem_forward_impl.5} parent=0 // pred_check
    _
  $region35: #{_eassfem_forward_impl.5} parent=0 // pred_check_branch
    %35 = sbr.rel (0) target = $region37
  $region36: #{_eassfem_forward_impl.5} parent=0 // pred_region
    _
  $region37: #{_eassfem_forward_impl.5} parent=0 // pred_fallthru
    _
  // Predicated region
  $region38: #{_eassfem_forward_impl.5} parent=0 // pred_check
    _
  $region39: #{_eassfem_forward_impl.5} parent=0 // pred_check_branch
    %37 = sbr.rel (0) target = $region41
  $region40: #{_eassfem_forward_impl.5} parent=0 // pred_region
    _
  $region41: #{_eassfem_forward_impl.5} parent=0 // pred_fallthru
    _
  // Predicated region
  $region42: #{_eassfem_forward_impl.5} parent=0 // pred_check
    _
  $region43: #{_eassfem_forward_impl.5} parent=0 // pred_check_branch
    %39 = sbr.rel (0) target = $region45
  $region44: #{_eassfem_forward_impl.5} parent=0 // pred_region
    _
  $region45: #{_eassfem_forward_impl.5} parent=0 // pred_fallthru
    _
  // Predicated region
  $region46: #{_eassfem_forward_impl.5} parent=0 // pred_check
    _
  $region47: #{_eassfem_forward_impl.5} parent=0 // pred_check_branch
    %41 = sbr.rel (0) target = $region49
  $region48: #{_eassfem_forward_impl.5} parent=0 // pred_region
    _
  $region49: #{_eassfem_forward_impl.5} parent=0 // pred_fallthru
    _
  // Predicated region
  $region50: #{_eassfem_forward_impl.5} parent=0 // pred_check
    _
  $region51: #{_eassfem_forward_impl.5} parent=0 // pred_check_branch
    %43 = sbr.rel (0) target = $region53
  $region52: #{_eassfem_forward_impl.5} parent=0 // pred_region
    _
  $region53: #{_eassfem_forward_impl.5} parent=0 // pred_fallthru
    _
  %v44 = vld [vmem:[%s0] sm:$0xff]
  %v45 = vld [vmem:[%s0 + $0x8] sm:$0xff]
  %v46 = vld [vmem:[%s0 + $0x10] sm:$0xff]
  %v47 = vld [vmem:[%s0 + $0x18] sm:$0xff]
  %v48 = vld [vmem:[%s0 + $0x20] sm:$0xff]
  %v49 = vld [vmem:[%s0 + $0x28] sm:$0xff]
  %v50 = vld [vmem:[%s0 + $0x30] sm:$0xff]
  %v51 = vld [vmem:[%s0 + $0x38] sm:$0xff]
  %v52 = vld [vmem:[%s1] sm:$0xff]
  %v53 = vld [vmem:[%s1 + $0x8] sm:$0xff]
  %v54 = vld [vmem:[%s2] sm:$0xff]
  %v55 = vld [vmem:[%s2 + $0x8] sm:$0xff]
  %57 = vset.pattern.permute.xlu0 0
  %58 = vperm.xlu0 %57, %v54
  %v59 = vpop.permute.xlu0 %58
  %62 = vset.pattern.permute.xlu0 0
  %63 = vperm.xlu0 %62, %v55
  %v64 = vpop.permute.xlu0 %63
  %vm66 = vcmask 130048
  %v68 = vsel %vm66, %v52, 0
  %v71 = vsel %vm66, %v53, 0
  %73 = vmatpush.msra.mxu0 0.0
  %74 = vmatpush.msra.mxu0 0.0
  %75 = vmatpush.msra.mxu0 0.0
  %76 = vmatpush.msra.mxu0 0.0
  %77 = vmatpush.msra.mxu0 0.0
  %78 = vmatpush.msra.mxu0 0.0
  %79 = vmatpush.msra.mxu0 0.0
  %80 = vmatpush.msra.mxu0 0.0
  %81 = vmatpush.msra.mxu0 0.0
  %82 = vmatpush.msra.mxu0 0.0
  %83 = vmatpush.msra.mxu0 0.0
  %84 = vmatpush.msra.mxu0 0.0
  %85 = vmatpush.msra.mxu0 0.0
  %86 = vmatpush.msra.mxu0 0.0
  %87 = vmatpush.msra.mxu0 %v48
  %88 = vmatpush.msra.mxu0 %v44
  %89 = vmatmul.f32.gmra.mxu0 %v68
  %v90 = vpop.f32.mrf.mxu0
  %v91 = vadd.f32 %v59, %v90
  %92 = vmatmul.f32.gmra.mxu0 %v71
  %v93 = vpop.f32.mrf.mxu0
  %v94 = vadd.f32 %v64, %v93
  %95 = vdwg.mxu0
  %96 = vmatpush.msra.mxu0 0.0
  %97 = vmatpush.msra.mxu0 0.0
  %98 = vmatpush.msra.mxu0 0.0
  %99 = vmatpush.msra.mxu0 0.0
  %100 = vmatpush.msra.mxu0 0.0
  %101 = vmatpush.msra.mxu0 0.0
  %102 = vmatpush.msra.mxu0 0.0
  %103 = vmatpush.msra.mxu0 0.0
  %104 = vmatpush.msra.mxu0 0.0
  %105 = vmatpush.msra.mxu0 0.0
  %106 = vmatpush.msra.mxu0 0.0
  %107 = vmatpush.msra.mxu0 0.0
  %108 = vmatpush.msra.mxu0 0.0
  %109 = vmatpush.msra.mxu0 0.0
  %110 = vmatpush.msra.mxu0 %v49
  %111 = vmatpush.msra.mxu0 %v45
  %112 = vmatmul.f32.gmra.mxu0 %v68
  %v113 = vpop.f32.mrf.mxu0
  %v114 = vadd.f32 %v59, %v113
  %115 = vmatmul.f32.gmra.mxu0 %v71
  %v116 = vpop.f32.mrf.mxu0
  %v117 = vadd.f32 %v64, %v116
  %118 = vdwg.mxu0
  %119 = vmatpush.msra.mxu0 0.0
  %120 = vmatpush.msra.mxu0 0.0
  %121 = vmatpush.msra.mxu0 0.0
  %122 = vmatpush.msra.mxu0 0.0
  %123 = vmatpush.msra.mxu0 0.0
  %124 = vmatpush.msra.mxu0 0.0
  %125 = vmatpush.msra.mxu0 0.0
  %126 = vmatpush.msra.mxu0 0.0
  %127 = vmatpush.msra.mxu0 0.0
  %128 = vmatpush.msra.mxu0 0.0
  %129 = vmatpush.msra.mxu0 0.0
  %130 = vmatpush.msra.mxu0 0.0
  %131 = vmatpush.msra.mxu0 0.0
  %132 = vmatpush.msra.mxu0 0.0
  %133 = vmatpush.msra.mxu0 %v50
  %134 = vmatpush.msra.mxu0 %v46
  %135 = vmatmul.f32.gmra.mxu0 %v68
  %v136 = vpop.f32.mrf.mxu0
  %v137 = vadd.f32 %v59, %v136
  %138 = vmatmul.f32.gmra.mxu0 %v71
  %v139 = vpop.f32.mrf.mxu0
  %v140 = vadd.f32 %v64, %v139
  %141 = vdwg.mxu0
  %142 = vmatpush.msra.mxu0 0.0
  %143 = vmatpush.msra.mxu0 0.0
  %144 = vmatpush.msra.mxu0 0.0
  %145 = vmatpush.msra.mxu0 0.0
  %146 = vmatpush.msra.mxu0 0.0
  %147 = vmatpush.msra.mxu0 0.0
  %148 = vmatpush.msra.mxu0 0.0
  %149 = vmatpush.msra.mxu0 0.0
  %150 = vmatpush.msra.mxu0 0.0
  %151 = vmatpush.msra.mxu0 0.0
  %152 = vmatpush.msra.mxu0 0.0
  %153 = vmatpush.msra.mxu0 0.0
  %154 = vmatpush.msra.mxu0 0.0
  %155 = vmatpush.msra.mxu0 0.0
  %156 = vmatpush.msra.mxu0 %v51
  %157 = vmatpush.msra.mxu0 %v47
  %158 = vmatmul.f32.gmra.mxu0 %v68
  %v159 = vpop.f32.mrf.mxu0
  %v160 = vadd.f32 %v59, %v159
  %161 = vmatmul.f32.gmra.mxu0 %v71
  %v162 = vpop.f32.mrf.mxu0
  %v163 = vadd.f32 %v64, %v162
  %164 = vdwg.mxu0
  %v165 = vadd.f32 %v91, %v44
  %v166 = vadd.f32 %v114, %v45
  %v167 = vadd.f32 %v137, %v46
  %v168 = vadd.f32 %v160, %v47
  %v169 = vadd.f32 %v94, %v48
  %v170 = vadd.f32 %v117, %v49
  %v171 = vadd.f32 %v140, %v50
  %v172 = vadd.f32 %v163, %v51
  %v173 = vld [vmem:[%s9] sm:$0xff]
  %v174 = vld [vmem:[%s9 + $0x8] sm:$0xff]
  %176 = vset.pattern.permute.xlu0 0
  %177 = vperm.xlu0 %176, %v173
  %v178 = vpop.permute.xlu0 %177
  %181 = vset.pattern.permute.xlu0 0
  %182 = vperm.xlu0 %181, %v174
  %v183 = vpop.permute.xlu0 %182
  %v185 = vmul.f32 %v165, %v178
  %v186 = vmul.f32 %v166, %v178
  %v187 = vmul.f32 %v167, %v178
  %v188 = vmul.f32 %v168, %v178
  %v189 = vmul.f32 %v169, %v183
  %v190 = vmul.f32 %v170, %v183
  %v191 = vmul.f32 %v171, %v183
  %v192 = vmul.f32 %v172, %v183
  %v193 = vld [vmem:[%s10] sm:$0xff]
  %v194 = vld [vmem:[%s10 + $0x8] sm:$0xff]
  %196 = vset.pattern.permute.xlu0 0
  %197 = vperm.xlu0 %196, %v193
  %v198 = vpop.permute.xlu0 %197
  %201 = vset.pattern.permute.xlu0 0
  %202 = vperm.xlu0 %201, %v194
  %v203 = vpop.permute.xlu0 %202
  %v205 = vadd.f32 %v185, %v198
  %v206 = vadd.f32 %v186, %v198
  %v207 = vadd.f32 %v187, %v198
  %v208 = vadd.f32 %v188, %v198
  %v209 = vadd.f32 %v189, %v203
  %v210 = vadd.f32 %v190, %v203
  %v211 = vadd.f32 %v191, %v203
  %v212 = vadd.f32 %v192, %v203
  %v213 = vld [vmem:[%s3] sm:$0xff]
  %v214 = vld [vmem:[%s3 + $0x8] sm:$0xff]
  %v215 = vld [vmem:[%s4] sm:$0xff]
  %v216 = vld [vmem:[%s4 + $0x8] sm:$0xff]
  %218 = vset.pattern.permute.xlu0 0
  %219 = vperm.xlu0 %218, %v215
  %v220 = vpop.permute.xlu0 %219
  %223 = vset.pattern.permute.xlu0 0
  %224 = vperm.xlu0 %223, %v216
  %v225 = vpop.permute.xlu0 %224
  %v228 = vsel %vm66, %v213, 0
  %v231 = vsel %vm66, %v214, 0
  %233 = vmatpush.msra.mxu0 0.0
  %234 = vmatpush.msra.mxu0 0.0
  %235 = vmatpush.msra.mxu0 0.0
  %236 = vmatpush.msra.mxu0 0.0
  %237 = vmatpush.msra.mxu0 0.0
  %238 = vmatpush.msra.mxu0 0.0
  %239 = vmatpush.msra.mxu0 0.0
  %240 = vmatpush.msra.mxu0 0.0
  %241 = vmatpush.msra.mxu0 0.0
  %242 = vmatpush.msra.mxu0 0.0
  %243 = vmatpush.msra.mxu0 0.0
  %244 = vmatpush.msra.mxu0 0.0
  %245 = vmatpush.msra.mxu0 0.0
  %246 = vmatpush.msra.mxu0 0.0
  %247 = vmatpush.msra.mxu0 %v209
  %248 = vmatpush.msra.mxu0 %v205
  %249 = vmatmul.f32.gmra.mxu0 %v228
  %v250 = vpop.f32.mrf.mxu0
  %v251 = vadd.f32 %v220, %v250
  %252 = vmatmul.f32.gmra.mxu0 %v231
  %v253 = vpop.f32.mrf.mxu0
  %v254 = vadd.f32 %v225, %v253
  %255 = vdwg.mxu0
  %256 = vmatpush.msra.mxu0 0.0
  %257 = vmatpush.msra.mxu0 0.0
  %258 = vmatpush.msra.mxu0 0.0
  %259 = vmatpush.msra.mxu0 0.0
  %260 = vmatpush.msra.mxu0 0.0
  %261 = vmatpush.msra.mxu0 0.0
  %262 = vmatpush.msra.mxu0 0.0
  %263 = vmatpush.msra.mxu0 0.0
  %264 = vmatpush.msra.mxu0 0.0
  %265 = vmatpush.msra.mxu0 0.0
  %266 = vmatpush.msra.mxu0 0.0
  %267 = vmatpush.msra.mxu0 0.0
  %268 = vmatpush.msra.mxu0 0.0
  %269 = vmatpush.msra.mxu0 0.0
  %270 = vmatpush.msra.mxu0 %v210
  %271 = vmatpush.msra.mxu0 %v206
  %272 = vmatmul.f32.gmra.mxu0 %v228
  %v273 = vpop.f32.mrf.mxu0
  %v274 = vadd.f32 %v220, %v273
  %275 = vmatmul.f32.gmra.mxu0 %v231
  %v276 = vpop.f32.mrf.mxu0
  %v277 = vadd.f32 %v225, %v276
  %278 = vdwg.mxu0
  %279 = vmatpush.msra.mxu0 0.0
  %280 = vmatpush.msra.mxu0 0.0
  %281 = vmatpush.msra.mxu0 0.0
  %282 = vmatpush.msra.mxu0 0.0
  %283 = vmatpush.msra.mxu0 0.0
  %284 = vmatpush.msra.mxu0 0.0
  %285 = vmatpush.msra.mxu0 0.0
  %286 = vmatpush.msra.mxu0 0.0
  %287 = vmatpush.msra.mxu0 0.0
  %288 = vmatpush.msra.mxu0 0.0
  %289 = vmatpush.msra.mxu0 0.0
  %290 = vmatpush.msra.mxu0 0.0
  %291 = vmatpush.msra.mxu0 0.0
  %292 = vmatpush.msra.mxu0 0.0
  %293 = vmatpush.msra.mxu0 %v211
  %294 = vmatpush.msra.mxu0 %v207
  %295 = vmatmul.f32.gmra.mxu0 %v228
  %v296 = vpop.f32.mrf.mxu0
  %v297 = vadd.f32 %v220, %v296
  %298 = vmatmul.f32.gmra.mxu0 %v231
  %v299 = vpop.f32.mrf.mxu0
  %v300 = vadd.f32 %v225, %v299
  %301 = vdwg.mxu0
  %302 = vmatpush.msra.mxu0 0.0
  %303 = vmatpush.msra.mxu0 0.0
  %304 = vmatpush.msra.mxu0 0.0
  %305 = vmatpush.msra.mxu0 0.0
  %306 = vmatpush.msra.mxu0 0.0
  %307 = vmatpush.msra.mxu0 0.0
  %308 = vmatpush.msra.mxu0 0.0
  %309 = vmatpush.msra.mxu0 0.0
  %310 = vmatpush.msra.mxu0 0.0
  %311 = vmatpush.msra.mxu0 0.0
  %312 = vmatpush.msra.mxu0 0.0
  %313 = vmatpush.msra.mxu0 0.0
  %314 = vmatpush.msra.mxu0 0.0
  %315 = vmatpush.msra.mxu0 0.0
  %316 = vmatpush.msra.mxu0 %v212
  %317 = vmatpush.msra.mxu0 %v208
  %318 = vmatmul.f32.gmra.mxu0 %v228
  %v319 = vpop.f32.mrf.mxu0
  %v320 = vadd.f32 %v220, %v319
  %321 = vmatmul.f32.gmra.mxu0 %v231
  %v322 = vpop.f32.mrf.mxu0
  %v323 = vadd.f32 %v225, %v322
  %324 = vdwg.mxu0
  %v325 = vadd.f32 %v205, %v251
  %v326 = vadd.f32 %v206, %v274
  %v327 = vadd.f32 %v207, %v297
  %v328 = vadd.f32 %v208, %v320
  %v329 = vadd.f32 %v209, %v254
  %v330 = vadd.f32 %v210, %v277
  %v331 = vadd.f32 %v211, %v300
  %v332 = vadd.f32 %v212, %v323
  %v333 = vadd.f32 %v325, %v165
  %v334 = vadd.f32 %v326, %v166
  %v335 = vadd.f32 %v327, %v167
  %v336 = vadd.f32 %v328, %v168
  %v337 = vadd.f32 %v329, %v169
  %v338 = vadd.f32 %v330, %v170
  %v339 = vadd.f32 %v331, %v171
  %v340 = vadd.f32 %v332, %v172
  %v341 = vld [vmem:[%s11] sm:$0xff]
  %v342 = vld [vmem:[%s11 + $0x8] sm:$0xff]
  %344 = vset.pattern.permute.xlu0 0
  %345 = vperm.xlu0 %344, %v341
  %v346 = vpop.permute.xlu0 %345
  %349 = vset.pattern.permute.xlu0 0
  %350 = vperm.xlu0 %349, %v342
  %v351 = vpop.permute.xlu0 %350
  %v353 = vmul.f32 %v333, %v346
  %v354 = vmul.f32 %v334, %v346
  %v355 = vmul.f32 %v335, %v346
  %v356 = vmul.f32 %v336, %v346
  %v357 = vmul.f32 %v337, %v351
  %v358 = vmul.f32 %v338, %v351
  %v359 = vmul.f32 %v339, %v351
  %v360 = vmul.f32 %v340, %v351
  %v361 = vld [vmem:[%s12] sm:$0xff]
  %v362 = vld [vmem:[%s12 + $0x8] sm:$0xff]
  %364 = vset.pattern.permute.xlu0 0
  %365 = vperm.xlu0 %364, %v361
  %v366 = vpop.permute.xlu0 %365
  %369 = vset.pattern.permute.xlu0 0
  %370 = vperm.xlu0 %369, %v362
  %v371 = vpop.permute.xlu0 %370
  %v373 = vadd.f32 %v353, %v366
  %v374 = vadd.f32 %v354, %v366
  %v375 = vadd.f32 %v355, %v366
  %v376 = vadd.f32 %v356, %v366
  %v377 = vadd.f32 %v357, %v371
  %v378 = vadd.f32 %v358, %v371
  %v379 = vadd.f32 %v359, %v371
  %v380 = vadd.f32 %v360, %v371
  %v381 = vld [vmem:[%s5] sm:$0xff]
  %v382 = vld [vmem:[%s5 + $0x8] sm:$0xff]
  %v383 = vld [vmem:[%s6] sm:$0xff]
  %v384 = vld [vmem:[%s6 + $0x8] sm:$0xff]
  %386 = vset.pattern.permute.xlu0 0
  %387 = vperm.xlu0 %386, %v383
  %v388 = vpop.permute.xlu0 %387
  %391 = vset.pattern.permute.xlu0 0
  %392 = vperm.xlu0 %391, %v384
  %v393 = vpop.permute.xlu0 %392
  %v396 = vsel %vm66, %v381, 0
  %v399 = vsel %vm66, %v382, 0
  %401 = vmatpush.msra.mxu0 0.0
  %402 = vmatpush.msra.mxu0 0.0
  %403 = vmatpush.msra.mxu0 0.0
  %404 = vmatpush.msra.mxu0 0.0
  %405 = vmatpush.msra.mxu0 0.0
  %406 = vmatpush.msra.mxu0 0.0
  %407 = vmatpush.msra.mxu0 0.0
  %408 = vmatpush.msra.mxu0 0.0
  %409 = vmatpush.msra.mxu0 0.0
  %410 = vmatpush.msra.mxu0 0.0
  %411 = vmatpush.msra.mxu0 0.0
  %412 = vmatpush.msra.mxu0 0.0
  %413 = vmatpush.msra.mxu0 0.0
  %414 = vmatpush.msra.mxu0 0.0
  %415 = vmatpush.msra.mxu0 %v377
  %416 = vmatpush.msra.mxu0 %v373
  %417 = vmatmul.f32.gmra.mxu0 %v396
  %v418 = vpop.f32.mrf.mxu0
  %v419 = vadd.f32 %v388, %v418
  %420 = vmatmul.f32.gmra.mxu0 %v399
  %v421 = vpop.f32.mrf.mxu0
  %v422 = vadd.f32 %v393, %v421
  %423 = vdwg.mxu0
  %424 = vmatpush.msra.mxu0 0.0
  %425 = vmatpush.msra.mxu0 0.0
  %426 = vmatpush.msra.mxu0 0.0
  %427 = vmatpush.msra.mxu0 0.0
  %428 = vmatpush.msra.mxu0 0.0
  %429 = vmatpush.msra.mxu0 0.0
  %430 = vmatpush.msra.mxu0 0.0
  %431 = vmatpush.msra.mxu0 0.0
  %432 = vmatpush.msra.mxu0 0.0
  %433 = vmatpush.msra.mxu0 0.0
  %434 = vmatpush.msra.mxu0 0.0
  %435 = vmatpush.msra.mxu0 0.0
  %436 = vmatpush.msra.mxu0 0.0
  %437 = vmatpush.msra.mxu0 0.0
  %438 = vmatpush.msra.mxu0 %v378
  %439 = vmatpush.msra.mxu0 %v374
  %440 = vmatmul.f32.gmra.mxu0 %v396
  %v441 = vpop.f32.mrf.mxu0
  %v442 = vadd.f32 %v388, %v441
  %443 = vmatmul.f32.gmra.mxu0 %v399
  %v444 = vpop.f32.mrf.mxu0
  %v445 = vadd.f32 %v393, %v444
  %446 = vdwg.mxu0
  %447 = vmatpush.msra.mxu0 0.0
  %448 = vmatpush.msra.mxu0 0.0
  %449 = vmatpush.msra.mxu0 0.0
  %450 = vmatpush.msra.mxu0 0.0
  %451 = vmatpush.msra.mxu0 0.0
  %452 = vmatpush.msra.mxu0 0.0
  %453 = vmatpush.msra.mxu0 0.0
  %454 = vmatpush.msra.mxu0 0.0
  %455 = vmatpush.msra.mxu0 0.0
  %456 = vmatpush.msra.mxu0 0.0
  %457 = vmatpush.msra.mxu0 0.0
  %458 = vmatpush.msra.mxu0 0.0
  %459 = vmatpush.msra.mxu0 0.0
  %460 = vmatpush.msra.mxu0 0.0
  %461 = vmatpush.msra.mxu0 %v379
  %462 = vmatpush.msra.mxu0 %v375
  %463 = vmatmul.f32.gmra.mxu0 %v396
  %v464 = vpop.f32.mrf.mxu0
  %v465 = vadd.f32 %v388, %v464
  %466 = vmatmul.f32.gmra.mxu0 %v399
  %v467 = vpop.f32.mrf.mxu0
  %v468 = vadd.f32 %v393, %v467
  %469 = vdwg.mxu0
  %470 = vmatpush.msra.mxu0 0.0
  %471 = vmatpush.msra.mxu0 0.0
  %472 = vmatpush.msra.mxu0 0.0
  %473 = vmatpush.msra.mxu0 0.0
  %474 = vmatpush.msra.mxu0 0.0
  %475 = vmatpush.msra.mxu0 0.0
  %476 = vmatpush.msra.mxu0 0.0
  %477 = vmatpush.msra.mxu0 0.0
  %478 = vmatpush.msra.mxu0 0.0
  %479 = vmatpush.msra.mxu0 0.0
  %480 = vmatpush.msra.mxu0 0.0
  %481 = vmatpush.msra.mxu0 0.0
  %482 = vmatpush.msra.mxu0 0.0
  %483 = vmatpush.msra.mxu0 0.0
  %484 = vmatpush.msra.mxu0 %v380
  %485 = vmatpush.msra.mxu0 %v376
  %486 = vmatmul.f32.gmra.mxu0 %v396
  %v487 = vpop.f32.mrf.mxu0
  %v488 = vadd.f32 %v388, %v487
  %489 = vmatmul.f32.gmra.mxu0 %v399
  %v490 = vpop.f32.mrf.mxu0
  %v491 = vadd.f32 %v393, %v490
  %492 = vdwg.mxu0
  %v493 = vmul.f32 %v419, 0.5
  %v494 = vmul.f32 %v442, 0.5
  %v495 = vmul.f32 %v465, 0.5
  %v496 = vmul.f32 %v488, 0.5
  %v497 = vmul.f32 %v422, 0.5
  %v498 = vmul.f32 %v445, 0.5
  %v499 = vmul.f32 %v468, 0.5
  %v500 = vmul.f32 %v491, 0.5
  %v501 = vmul.f32 %v419, 0.70710677
  %v502 = vmul.f32 %v442, 0.70710677
  %v503 = vmul.f32 %v465, 0.70710677
  %v504 = vmul.f32 %v488, 0.70710677
  %v505 = vmul.f32 %v422, 0.70710677
  %v506 = vmul.f32 %v445, 0.70710677
  %v507 = vmul.f32 %v468, 0.70710677
  %v508 = vmul.f32 %v491, 0.70710677
  %v509 = vmul.f32 %v501, %v501
  %v510 = vmin.f32 16.0, %v509
  %v511 = vmul.f32 %v510, 2.1237322e-06
  %v512 = vadd.f32 %v511, 0.00028619796
  %v513 = vmul.f32 %v510, %v512
  %v514 = vadd.f32 %v513, 0.0036580483
  %v515 = vmul.f32 %v510, %v514
  %v516 = vadd.f32 %v515, 0.05243302
  %v517 = vmul.f32 %v510, %v516
  %v518 = vadd.f32 %v517, 0.18741608
  %v519 = vmul.f32 %v510, %v518
  %v520 = vadd.f32 %v519, 1.1283791
  %v521 = vmul.f32 %v501, %v520
  %v522 = vmul.f32 %v510, 3.8918573e-05
  %v523 = vadd.f32 %v522, 0.001143296
  %v524 = vmul.f32 %v510, %v523
  %v525 = vadd.f32 %v524, 0.014752088
  %v526 = vmul.f32 %v510, %v525
  %v527 = vadd.f32 %v526, 0.112945676
  %v528 = vmul.f32 %v510, %v527
  %v529 = vadd.f32 %v528, 0.4994258
  %v530 = vmul.f32 %v510, %v529
  %v531 = vadd.f32 %v530, 1.0
  %v532 = vrcp.pop %v531
  %v533 = vmul.f32 %v531, %v532
  %v534 = vsub.f32 1.0, %v533
  %v535 = vmul.f32 %v532, %v534
  %v536 = vadd.f32 %v532, %v535
  %vm537 = vweird.f32 %v531
  %vm538 = vweird.f32 %v532
  %vm539 = vmor %vm537, %vm538
  %v540 = vsel %vm539, %v532, %v536
  %v541 = vand.u32 2147483647, %v531
  %vm542 = vcmp.eq.f32.partialorder %v541, 8.507059e+37
  %v543 = vand.u32 %v531, 2147483648
  %v544 = vor.u32 1.1754944e-38, %v543
  %v545 = vsel %vm542, %v544, %v540
  %v546 = vmul.f32 %v521, %v545
  %v547 = vmin.f32 %v546, 1.0
  %v548 = vmax.f32 %v547, -1.0
  %v549 = vmul.f32 %v502, %v502
  %v550 = vmin.f32 16.0, %v549
  %v551 = vmul.f32 %v550, 2.1237322e-06
  %v552 = vadd.f32 %v551, 0.00028619796
  %v553 = vmul.f32 %v550, %v552
  %v554 = vadd.f32 %v553, 0.0036580483
  %v555 = vmul.f32 %v550, %v554
  %v556 = vadd.f32 %v555, 0.05243302
  %v557 = vmul.f32 %v550, %v556
  %v558 = vadd.f32 %v557, 0.18741608
  %v559 = vmul.f32 %v550, %v558
  %v560 = vadd.f32 %v559, 1.1283791
  %v561 = vmul.f32 %v502, %v560
  %v562 = vmul.f32 %v550, 3.8918573e-05
  %v563 = vadd.f32 %v562, 0.001143296
  %v564 = vmul.f32 %v550, %v563
  %v565 = vadd.f32 %v564, 0.014752088
  %v566 = vmul.f32 %v550, %v565
  %v567 = vadd.f32 %v566, 0.112945676
  %v568 = vmul.f32 %v550, %v567
  %v569 = vadd.f32 %v568, 0.4994258
  %v570 = vmul.f32 %v550, %v569
  %v571 = vadd.f32 %v570, 1.0
  %v572 = vrcp.pop %v571
  %v573 = vmul.f32 %v571, %v572
  %v574 = vsub.f32 1.0, %v573
  %v575 = vmul.f32 %v572, %v574
  %v576 = vadd.f32 %v572, %v575
  %vm577 = vweird.f32 %v571
  %vm578 = vweird.f32 %v572
  %vm579 = vmor %vm577, %vm578
  %v580 = vsel %vm579, %v572, %v576
  %v581 = vand.u32 2147483647, %v571
  %vm582 = vcmp.eq.f32.partialorder %v581, 8.507059e+37
  %v583 = vand.u32 %v571, 2147483648
  %v584 = vor.u32 1.1754944e-38, %v583
  %v585 = vsel %vm582, %v584, %v580
  %v586 = vmul.f32 %v561, %v585
  %v587 = vmin.f32 %v586, 1.0
  %v588 = vmax.f32 %v587, -1.0
  %v589 = vmul.f32 %v503, %v503
  %v590 = vmin.f32 16.0, %v589
  %v591 = vmul.f32 %v590, 2.1237322e-06
  %v592 = vadd.f32 %v591, 0.00028619796
  %v593 = vmul.f32 %v590, %v592
  %v594 = vadd.f32 %v593, 0.0036580483
  %v595 = vmul.f32 %v590, %v594
  %v596 = vadd.f32 %v595, 0.05243302
  %v597 = vmul.f32 %v590, %v596
  %v598 = vadd.f32 %v597, 0.18741608
  %v599 = vmul.f32 %v590, %v598
  %v600 = vadd.f32 %v599, 1.1283791
  %v601 = vmul.f32 %v503, %v600
  %v602 = vmul.f32 %v590, 3.8918573e-05
  %v603 = vadd.f32 %v602, 0.001143296
  %v604 = vmul.f32 %v590, %v603
  %v605 = vadd.f32 %v604, 0.014752088
  %v606 = vmul.f32 %v590, %v605
  %v607 = vadd.f32 %v606, 0.112945676
  %v608 = vmul.f32 %v590, %v607
  %v609 = vadd.f32 %v608, 0.4994258
  %v610 = vmul.f32 %v590, %v609
  %v611 = vadd.f32 %v610, 1.0
  %v612 = vrcp.pop %v611
  %v613 = vmul.f32 %v611, %v612
  %v614 = vsub.f32 1.0, %v613
  %v615 = vmul.f32 %v612, %v614
  %v616 = vadd.f32 %v612, %v615
  %vm617 = vweird.f32 %v611
  %vm618 = vweird.f32 %v612
  %vm619 = vmor %vm617, %vm618
  %v620 = vsel %vm619, %v612, %v616
  %v621 = vand.u32 2147483647, %v611
  %vm622 = vcmp.eq.f32.partialorder %v621, 8.507059e+37
  %v623 = vand.u32 %v611, 2147483648
  %v624 = vor.u32 1.1754944e-38, %v623
  %v625 = vsel %vm622, %v624, %v620
  %v626 = vmul.f32 %v601, %v625
  %v627 = vmin.f32 %v626, 1.0
  %v628 = vmax.f32 %v627, -1.0
  %v629 = vmul.f32 %v504, %v504
  %v630 = vmin.f32 16.0, %v629
  %v631 = vmul.f32 %v630, 2.1237322e-06
  %v632 = vadd.f32 %v631, 0.00028619796
  %v633 = vmul.f32 %v630, %v632
  %v634 = vadd.f32 %v633, 0.0036580483
  %v635 = vmul.f32 %v630, %v634
  %v636 = vadd.f32 %v635, 0.05243302
  %v637 = vmul.f32 %v630, %v636
  %v638 = vadd.f32 %v637, 0.18741608
  %v639 = vmul.f32 %v630, %v638
  %v640 = vadd.f32 %v639, 1.1283791
  %v641 = vmul.f32 %v504, %v640
  %v642 = vmul.f32 %v630, 3.8918573e-05
  %v643 = vadd.f32 %v642, 0.001143296
  %v644 = vmul.f32 %v630, %v643
  %v645 = vadd.f32 %v644, 0.014752088
  %v646 = vmul.f32 %v630, %v645
  %v647 = vadd.f32 %v646, 0.112945676
  %v648 = vmul.f32 %v630, %v647
  %v649 = vadd.f32 %v648, 0.4994258
  %v650 = vmul.f32 %v630, %v649
  %v651 = vadd.f32 %v650, 1.0
  %v652 = vrcp.pop %v651
  %v653 = vmul.f32 %v651, %v652
  %v654 = vsub.f32 1.0, %v653
  %v655 = vmul.f32 %v652, %v654
  %v656 = vadd.f32 %v652, %v655
  %vm657 = vweird.f32 %v651
  %vm658 = vweird.f32 %v652
  %vm659 = vmor %vm657, %vm658
  %v660 = vsel %vm659, %v652, %v656
  %v661 = vand.u32 2147483647, %v651
  %vm662 = vcmp.eq.f32.partialorder %v661, 8.507059e+37
  %v663 = vand.u32 %v651, 2147483648
  %v664 = vor.u32 1.1754944e-38, %v663
  %v665 = vsel %vm662, %v664, %v660
  %v666 = vmul.f32 %v641, %v665
  %v667 = vmin.f32 %v666, 1.0
  %v668 = vmax.f32 %v667, -1.0
  %v669 = vmul.f32 %v505, %v505
  %v670 = vmin.f32 16.0, %v669
  %v671 = vmul.f32 %v670, 2.1237322e-06
  %v672 = vadd.f32 %v671, 0.00028619796
  %v673 = vmul.f32 %v670, %v672
  %v674 = vadd.f32 %v673, 0.0036580483
  %v675 = vmul.f32 %v670, %v674
  %v676 = vadd.f32 %v675, 0.05243302
  %v677 = vmul.f32 %v670, %v676
  %v678 = vadd.f32 %v677, 0.18741608
  %v679 = vmul.f32 %v670, %v678
  %v680 = vadd.f32 %v679, 1.1283791
  %v681 = vmul.f32 %v505, %v680
  %v682 = vmul.f32 %v670, 3.8918573e-05
  %v683 = vadd.f32 %v682, 0.001143296
  %v684 = vmul.f32 %v670, %v683
  %v685 = vadd.f32 %v684, 0.014752088
  %v686 = vmul.f32 %v670, %v685
  %v687 = vadd.f32 %v686, 0.112945676
  %v688 = vmul.f32 %v670, %v687
  %v689 = vadd.f32 %v688, 0.4994258
  %v690 = vmul.f32 %v670, %v689
  %v691 = vadd.f32 %v690, 1.0
  %v692 = vrcp.pop %v691
  %v693 = vmul.f32 %v691, %v692
  %v694 = vsub.f32 1.0, %v693
  %v695 = vmul.f32 %v692, %v694
  %v696 = vadd.f32 %v692, %v695
  %vm697 = vweird.f32 %v691
  %vm698 = vweird.f32 %v692
  %vm699 = vmor %vm697, %vm698
  %v700 = vsel %vm699, %v692, %v696
  %v701 = vand.u32 2147483647, %v691
  %vm702 = vcmp.eq.f32.partialorder %v701, 8.507059e+37
  %v703 = vand.u32 %v691, 2147483648
  %v704 = vor.u32 1.1754944e-38, %v703
  %v705 = vsel %vm702, %v704, %v700
  %v706 = vmul.f32 %v681, %v705
  %v707 = vmin.f32 %v706, 1.0
  %v708 = vmax.f32 %v707, -1.0
  %v709 = vmul.f32 %v506, %v506
  %v710 = vmin.f32 16.0, %v709
  %v711 = vmul.f32 %v710, 2.1237322e-06
  %v712 = vadd.f32 %v711, 0.00028619796
  %v713 = vmul.f32 %v710, %v712
  %v714 = vadd.f32 %v713, 0.0036580483
  %v715 = vmul.f32 %v710, %v714
  %v716 = vadd.f32 %v715, 0.05243302
  %v717 = vmul.f32 %v710, %v716
  %v718 = vadd.f32 %v717, 0.18741608
  %v719 = vmul.f32 %v710, %v718
  %v720 = vadd.f32 %v719, 1.1283791
  %v721 = vmul.f32 %v506, %v720
  %v722 = vmul.f32 %v710, 3.8918573e-05
  %v723 = vadd.f32 %v722, 0.001143296
  %v724 = vmul.f32 %v710, %v723
  %v725 = vadd.f32 %v724, 0.014752088
  %v726 = vmul.f32 %v710, %v725
  %v727 = vadd.f32 %v726, 0.112945676
  %v728 = vmul.f32 %v710, %v727
  %v729 = vadd.f32 %v728, 0.4994258
  %v730 = vmul.f32 %v710, %v729
  %v731 = vadd.f32 %v730, 1.0
  %v732 = vrcp.pop %v731
  %v733 = vmul.f32 %v731, %v732
  %v734 = vsub.f32 1.0, %v733
  %v735 = vmul.f32 %v732, %v734
  %v736 = vadd.f32 %v732, %v735
  %vm737 = vweird.f32 %v731
  %vm738 = vweird.f32 %v732
  %vm739 = vmor %vm737, %vm738
  %v740 = vsel %vm739, %v732, %v736
  %v741 = vand.u32 2147483647, %v731
  %vm742 = vcmp.eq.f32.partialorder %v741, 8.507059e+37
  %v743 = vand.u32 %v731, 2147483648
  %v744 = vor.u32 1.1754944e-38, %v743
  %v745 = vsel %vm742, %v744, %v740
  %v746 = vmul.f32 %v721, %v745
  %v747 = vmin.f32 %v746, 1.0
  %v748 = vmax.f32 %v747, -1.0
  %v749 = vmul.f32 %v507, %v507
  %v750 = vmin.f32 16.0, %v749
  %v751 = vmul.f32 %v750, 2.1237322e-06
  %v752 = vadd.f32 %v751, 0.00028619796
  %v753 = vmul.f32 %v750, %v752
  %v754 = vadd.f32 %v753, 0.0036580483
  %v755 = vmul.f32 %v750, %v754
  %v756 = vadd.f32 %v755, 0.05243302
  %v757 = vmul.f32 %v750, %v756
  %v758 = vadd.f32 %v757, 0.18741608
  %v759 = vmul.f32 %v750, %v758
  %v760 = vadd.f32 %v759, 1.1283791
  %v761 = vmul.f32 %v507, %v760
  %v762 = vmul.f32 %v750, 3.8918573e-05
  %v763 = vadd.f32 %v762, 0.001143296
  %v764 = vmul.f32 %v750, %v763
  %v765 = vadd.f32 %v764, 0.014752088
  %v766 = vmul.f32 %v750, %v765
  %v767 = vadd.f32 %v766, 0.112945676
  %v768 = vmul.f32 %v750, %v767
  %v769 = vadd.f32 %v768, 0.4994258
  %v770 = vmul.f32 %v750, %v769
  %v771 = vadd.f32 %v770, 1.0
  %v772 = vrcp.pop %v771
  %v773 = vmul.f32 %v771, %v772
  %v774 = vsub.f32 1.0, %v773
  %v775 = vmul.f32 %v772, %v774
  %v776 = vadd.f32 %v772, %v775
  %vm777 = vweird.f32 %v771
  %vm778 = vweird.f32 %v772
  %vm779 = vmor %vm777, %vm778
  %v780 = vsel %vm779, %v772, %v776
  %v781 = vand.u32 2147483647, %v771
  %vm782 = vcmp.eq.f32.partialorder %v781, 8.507059e+37
  %v783 = vand.u32 %v771, 2147483648
  %v784 = vor.u32 1.1754944e-38, %v783
  %v785 = vsel %vm782, %v784, %v780
  %v786 = vmul.f32 %v761, %v785
  %v787 = vmin.f32 %v786, 1.0
  %v788 = vmax.f32 %v787, -1.0
  %v789 = vmul.f32 %v508, %v508
  %v790 = vmin.f32 16.0, %v789
  %v791 = vmul.f32 %v790, 2.1237322e-06
  %v792 = vadd.f32 %v791, 0.00028619796
  %v793 = vmul.f32 %v790, %v792
  %v794 = vadd.f32 %v793, 0.0036580483
  %v795 = vmul.f32 %v790, %v794
  %v796 = vadd.f32 %v795, 0.05243302
  %v797 = vmul.f32 %v790, %v796
  %v798 = vadd.f32 %v797, 0.18741608
  %v799 = vmul.f32 %v790, %v798
  %v800 = vadd.f32 %v799, 1.1283791
  %v801 = vmul.f32 %v508, %v800
  %v802 = vmul.f32 %v790, 3.8918573e-05
  %v803 = vadd.f32 %v802, 0.001143296
  %v804 = vmul.f32 %v790, %v803
  %v805 = vadd.f32 %v804, 0.014752088
  %v806 = vmul.f32 %v790, %v805
  %v807 = vadd.f32 %v806, 0.112945676
  %v808 = vmul.f32 %v790, %v807
  %v809 = vadd.f32 %v808, 0.4994258
  %v810 = vmul.f32 %v790, %v809
  %v811 = vadd.f32 %v810, 1.0
  %v812 = vrcp.pop %v811
  %v813 = vmul.f32 %v811, %v812
  %v814 = vsub.f32 1.0, %v813
  %v815 = vmul.f32 %v812, %v814
  %v816 = vadd.f32 %v812, %v815
  %vm817 = vweird.f32 %v811
  %vm818 = vweird.f32 %v812
  %vm819 = vmor %vm817, %vm818
  %v820 = vsel %vm819, %v812, %v816
  %v821 = vand.u32 2147483647, %v811
  %vm822 = vcmp.eq.f32.partialorder %v821, 8.507059e+37
  %v823 = vand.u32 %v811, 2147483648
  %v824 = vor.u32 1.1754944e-38, %v823
  %v825 = vsel %vm822, %v824, %v820
  %v826 = vmul.f32 %v801, %v825
  %v827 = vmin.f32 %v826, 1.0
  %v828 = vmax.f32 %v827, -1.0
  %v829 = vadd.f32 %v548, 1.0
  %v830 = vadd.f32 %v588, 1.0
  %v831 = vadd.f32 %v628, 1.0
  %v832 = vadd.f32 %v668, 1.0
  %v833 = vadd.f32 %v708, 1.0
  %v834 = vadd.f32 %v748, 1.0
  %v835 = vadd.f32 %v788, 1.0
  %v836 = vadd.f32 %v828, 1.0
  %v837 = vmul.f32 %v493, %v829
  %v838 = vmul.f32 %v494, %v830
  %v839 = vmul.f32 %v495, %v831
  %v840 = vmul.f32 %v496, %v832
  %v841 = vmul.f32 %v497, %v833
  %v842 = vmul.f32 %v498, %v834
  %v843 = vmul.f32 %v499, %v835
  %v844 = vmul.f32 %v500, %v836
  %v845 = vld [vmem:[%s7] sm:$0xff]
  %v846 = vld [vmem:[%s7 + $0x8] sm:$0xff]
  %v847 = vld [vmem:[%s8] sm:$0xff]
  %v848 = vld [vmem:[%s8 + $0x8] sm:$0xff]
  %850 = vset.pattern.permute.xlu0 0
  %851 = vperm.xlu0 %850, %v847
  %v852 = vpop.permute.xlu0 %851
  %855 = vset.pattern.permute.xlu0 0
  %856 = vperm.xlu0 %855, %v848
  %v857 = vpop.permute.xlu0 %856
  %v860 = vsel %vm66, %v845, 0
  %v863 = vsel %vm66, %v846, 0
  %865 = vmatpush.msra.mxu0 0.0
  %866 = vmatpush.msra.mxu0 0.0
  %867 = vmatpush.msra.mxu0 0.0
  %868 = vmatpush.msra.mxu0 0.0
  %869 = vmatpush.msra.mxu0 0.0
  %870 = vmatpush.msra.mxu0 0.0
  %871 = vmatpush.msra.mxu0 0.0
  %872 = vmatpush.msra.mxu0 0.0
  %873 = vmatpush.msra.mxu0 0.0
  %874 = vmatpush.msra.mxu0 0.0
  %875 = vmatpush.msra.mxu0 0.0
  %876 = vmatpush.msra.mxu0 0.0
  %877 = vmatpush.msra.mxu0 0.0
  %878 = vmatpush.msra.mxu0 0.0
  %879 = vmatpush.msra.mxu0 %v841
  %880 = vmatpush.msra.mxu0 %v837
  %881 = vmatmul.f32.gmra.mxu0 %v860
  %v882 = vpop.f32.mrf.mxu0
  %v883 = vadd.f32 %v852, %v882
  %884 = vmatmul.f32.gmra.mxu0 %v863
  %v885 = vpop.f32.mrf.mxu0
  %v886 = vadd.f32 %v857, %v885
  %887 = vdwg.mxu0
  %888 = vmatpush.msra.mxu0 0.0
  %889 = vmatpush.msra.mxu0 0.0
  %890 = vmatpush.msra.mxu0 0.0
  %891 = vmatpush.msra.mxu0 0.0
  %892 = vmatpush.msra.mxu0 0.0
  %893 = vmatpush.msra.mxu0 0.0
  %894 = vmatpush.msra.mxu0 0.0
  %895 = vmatpush.msra.mxu0 0.0
  %896 = vmatpush.msra.mxu0 0.0
  %897 = vmatpush.msra.mxu0 0.0
  %898 = vmatpush.msra.mxu0 0.0
  %899 = vmatpush.msra.mxu0 0.0
  %900 = vmatpush.msra.mxu0 0.0
  %901 = vmatpush.msra.mxu0 0.0
  %902 = vmatpush.msra.mxu0 %v842
  %903 = vmatpush.msra.mxu0 %v838
  %904 = vmatmul.f32.gmra.mxu0 %v860
  %v905 = vpop.f32.mrf.mxu0
  %v906 = vadd.f32 %v852, %v905
  %907 = vmatmul.f32.gmra.mxu0 %v863
  %v908 = vpop.f32.mrf.mxu0
  %v909 = vadd.f32 %v857, %v908
  %910 = vdwg.mxu0
  %911 = vmatpush.msra.mxu0 0.0
  %912 = vmatpush.msra.mxu0 0.0
  %913 = vmatpush.msra.mxu0 0.0
  %914 = vmatpush.msra.mxu0 0.0
  %915 = vmatpush.msra.mxu0 0.0
  %916 = vmatpush.msra.mxu0 0.0
  %917 = vmatpush.msra.mxu0 0.0
  %918 = vmatpush.msra.mxu0 0.0
  %919 = vmatpush.msra.mxu0 0.0
  %920 = vmatpush.msra.mxu0 0.0
  %921 = vmatpush.msra.mxu0 0.0
  %922 = vmatpush.msra.mxu0 0.0
  %923 = vmatpush.msra.mxu0 0.0
  %924 = vmatpush.msra.mxu0 0.0
  %925 = vmatpush.msra.mxu0 %v843
  %926 = vmatpush.msra.mxu0 %v839
  %927 = vmatmul.f32.gmra.mxu0 %v860
  %v928 = vpop.f32.mrf.mxu0
  %v929 = vadd.f32 %v852, %v928
  %930 = vmatmul.f32.gmra.mxu0 %v863
  %v931 = vpop.f32.mrf.mxu0
  %v932 = vadd.f32 %v857, %v931
  %933 = vdwg.mxu0
  %934 = vmatpush.msra.mxu0 0.0
  %935 = vmatpush.msra.mxu0 0.0
  %936 = vmatpush.msra.mxu0 0.0
  %937 = vmatpush.msra.mxu0 0.0
  %938 = vmatpush.msra.mxu0 0.0
  %939 = vmatpush.msra.mxu0 0.0
  %940 = vmatpush.msra.mxu0 0.0
  %941 = vmatpush.msra.mxu0 0.0
  %942 = vmatpush.msra.mxu0 0.0
  %943 = vmatpush.msra.mxu0 0.0
  %944 = vmatpush.msra.mxu0 0.0
  %945 = vmatpush.msra.mxu0 0.0
  %946 = vmatpush.msra.mxu0 0.0
  %947 = vmatpush.msra.mxu0 0.0
  %948 = vmatpush.msra.mxu0 %v844
  %949 = vmatpush.msra.mxu0 %v840
  %950 = vmatmul.f32.gmra.mxu0 %v860
  %v951 = vpop.f32.mrf.mxu0
  %v952 = vadd.f32 %v852, %v951
  %953 = vmatmul.f32.gmra.mxu0 %v863
  %v954 = vpop.f32.mrf.mxu0
  %v955 = vadd.f32 %v857, %v954
  %956 = vdwg.mxu0
  %v957 = vadd.f32 %v883, %v333
  %v958 = vadd.f32 %v906, %v334
  %v959 = vadd.f32 %v929, %v335
  %v960 = vadd.f32 %v952, %v336
  %v961 = vadd.f32 %v886, %v337
  %v962 = vadd.f32 %v909, %v338
  %v963 = vadd.f32 %v932, %v339
  %v964 = vadd.f32 %v955, %v340
  %965 = vst [vmem:[%s13] sm:$0xff] %v957
  %966 = vst [vmem:[%s13 + $0x8] sm:$0xff] %v958
  %967 = vst [vmem:[%s13 + $0x10] sm:$0xff] %v959
  %968 = vst [vmem:[%s13 + $0x18] sm:$0xff] %v960
  %969 = vst [vmem:[%s13 + $0x20] sm:$0xff] %v961
  %970 = vst [vmem:[%s13 + $0x28] sm:$0xff] %v962
  %971 = vst [vmem:[%s13 + $0x30] sm:$0xff] %v963
  %972 = vst [vmem:[%s13 + $0x38] sm:$0xff] %v964
  // Predicated region
  $region54: #{_eassfem_forward_impl.5} parent=0 // pred_check
    _
  $region55: #{_eassfem_forward_impl.5} parent=0 // pred_check_branch
    %974 = sbr.rel (0) target = $region57
  $region56: #{_eassfem_forward_impl.5} parent=0 // pred_region
    _
  $region57: #{_eassfem_forward_impl.5} parent=0 // pred_fallthru
    _
  // Predicated region
  $region58: #{_eassfem_forward_impl.5} parent=0 // pred_check
    _
  $region59: #{_eassfem_forward_impl.5} parent=0 // pred_check_branch
    %976 = sbr.rel (0) target = $region61
  $region60: #{_eassfem_forward_impl.5} parent=0 // pred_region
    _
  $region61: #{_eassfem_forward_impl.5} parent=0 // pred_fallthru
    _

</llo_original>
